<compile_context>
chip_gen: v5e
topology: v5e:2x2
jax: 0.10.0
libtpu: 0.0.40
codegen_flags: <defaults>
</compile_context>

<pallas_src>
import numpy as np
import jax
import jax.numpy as jnp
from jax.experimental import pallas as pl
from jax.experimental.pallas import tpu as pltpu


# ----------------------------------------------------------------------------
# Host-side rotary tables -- exactly the PyTorch construction, including the
# (i-1) exponent and the interleaved (2i, 2i+1) pairing:
#   rot[p, 2i]   =  x[p,2i]*cos(p*th_i) + x[p,2i+1]*sin(p*th_i)
#   rot[p, 2i+1] = -x[p,2i]*sin(p*th_i) + x[p,2i+1]*cos(p*th_i)
# evaluated in-kernel as  rot = x*cos + shift_left(x)*sinA + shift_right(x)*sinB
# (sinA is zero on odd columns, sinB is zero on even columns, so the wrapped-in
#  boundary columns of the shifts are masked out exactly).
# ----------------------------------------------------------------------------
def rope_tables(context_window, embedding_dim):
    half = embedding_dim // 2
    i = np.arange(half, dtype=np.float64)
    theta = 10000.0 ** (-2.0 * (i - 1.0) / embedding_dim)
    ang = np.arange(context_window, dtype=np.float64)[:, None] * theta[None, :]
    cos = np.repeat(np.cos(ang), 2, axis=1)                                   # [c,c,...]
    s = np.sin(ang)
    z = np.zeros_like(s)
    sinA = np.stack([s, z], axis=-1).reshape(context_window, embedding_dim)   # [s,0,...]
    sinB = np.stack([z, -s], axis=-1).reshape(context_window, embedding_dim)  # [0,-s,...]
    f32 = jnp.float32
    return jnp.asarray(cos, f32), jnp.asarray(sinA, f32), jnp.asarray(sinB, f32)


def _rearrange_perm(dim, factor):
    # 0/1 permutation matrix P with P[c*F + p, p*C + c] = 1   (C = dim // factor)
    C = dim // factor
    P = np.zeros((dim, dim), dtype=np.float32)
    for c in range(C):
        for p in range(factor):
            P[c * factor + p, p * C + c] = 1.0
    return P


def _rotate_pairs(x, cos, sinA, sinB):
    # interleaved-pair rotary; neighbours via lane slice+concat (portable roll)
    nb_hi = jnp.concatenate([x[..., 1:], x[..., :1]], axis=-1)    # x[..., j+1]
    nb_lo = jnp.concatenate([x[..., -1:], x[..., :-1]], axis=-1)  # x[..., j-1]
    return x * cos + nb_hi * sinA + nb_lo * sinB


# ----------------------------------------------------------------------------
# The fused kernel: one batch element per grid step (everything VMEM resident).
# ----------------------------------------------------------------------------
def rope_block_kernel(x_ref, scale_ref, w1_ref, wp_ref, b_ref,
                      cos1_ref, sa1_ref, sb1_ref,
                      w2_ref, cos2_ref, sa2_ref, sb2_ref,
                      pf_ref, pb_ref, o_ref):
    L, D = scale_ref.shape
    H = wp_ref.shape[0] // D            # heads
    C = cos2_ref.shape[0]               # dim // factor
    F = D // C                          # factor
    PL = w2_ref.shape[0]                # seq_len * factor
    bf16, f32 = jnp.bfloat16, jnp.float32
    sqrt_n = float(np.sqrt(L * D))

    x = x_ref[0]                        # (L, D) f32
    scale = scale_ref[...]

    # ---- RMSNorm #1: per-batch Frobenius norm over the whole (L, D) slab ----
    ss = jnp.sum(jnp.sum(x * x, axis=-1, keepdims=True), axis=-2, keepdims=True)
    x1 = scale * (x * (jax.lax.rsqrt(ss) * sqrt_n))                # (L, D)

    # ---- fused q|k|v projection, all heads at once (bf16 MXU, f32 acc) ----
    qkv = jnp.dot(x1.astype(bf16), w1_ref[...],
                  preferred_element_type=f32)                      # (L, 3*H*D)

    # ---- head split (static lane slices at multiples of D), batched over H ----
    q = jnp.stack([qkv[:, (0 * H + h) * D:(0 * H + h + 1) * D] for h in range(H)], axis=0)
    k = jnp.stack([qkv[:, (1 * H + h) * D:(1 * H + h + 1) * D] for h in range(H)], axis=0)
    v = jnp.stack([qkv[:, (2 * H + h) * D:(2 * H + h + 1) * D] for h in range(H)], axis=0)

    # ---- interleaved-pair rotary (pure VPU; table broadcasts hoisted once) ----
    cos1 = jnp.broadcast_to(cos1_ref[...], (H, L, D))
    sa1 = jnp.broadcast_to(sa1_ref[...], (H, L, D))
    sb1 = jnp.broadcast_to(sb1_ref[...], (H, L, D))
    q_rot = _rotate_pairs(q, cos1, sa1, sb1)
    k_rot = _rotate_pairs(k, cos1, sa1, sb1)

    # ---- attention, all heads batched (1/sqrt(D) pre-folded into Wq) ----
    s = jnp.einsum('hqd,hkd->hqk', q_rot.astype(bf16), k_rot.astype(bf16),
                   preferred_element_type=f32)                     # (H, L, L)
    s = s - jnp.max(s, axis=-1, keepdims=True)
    e = jnp.exp(s)
    p = e / jnp.sum(e, axis=-1, keepdims=True)                     # exact softmax
    heads_out = jnp.einsum('hqk,hkd->hqd', p.astype(bf16), v.astype(bf16),
                           preferred_element_type=f32)             # (H, L, D)

    # ---- single stacked output projection + residual ----
    cat = jnp.concatenate([heads_out[h] for h in range(H)], axis=-1)   # (L, H*D)
    proj = jnp.dot(cat.astype(bf16), wp_ref[...],
                   preferred_element_type=f32) + b_ref[...]
    x2 = x1 + proj

    # ---- RMSNorm #2 (same scale parameter) ----
    ss2 = jnp.sum(jnp.sum(x2 * x2, axis=-1, keepdims=True), axis=-2, keepdims=True)
    x3 = scale * (x2 * (jax.lax.rsqrt(ss2) * sqrt_n))

    # ---- rearrange 'l (c p) -> c (p l)' on the VMEM value ----
    # exact 0/1 column-permutation matmul, regroup lane blocks onto sublanes,
    # then one small 2-D transpose.
    x3p = jnp.dot(x3, pf_ref[...], preferred_element_type=f32)     # cols -> (p, c) order
    xtT = jnp.concatenate([x3p[:, pp * C:(pp + 1) * C] for pp in range(F)], axis=0)  # (PL, C)
    xt = xtT.T                                                     # (C, PL)

    # ---- transposed single-head RoPE attention + residual ----
    qkv2 = jnp.dot(xt.astype(bf16), w2_ref[...],
                   preferred_element_type=f32)                     # (C, 3*PL)
    q2 = qkv2[:, 0 * PL:1 * PL]
    k2 = qkv2[:, 1 * PL:2 * PL]
    v2 = qkv2[:, 2 * PL:3 * PL]
    q2r = _rotate_pairs(q2, cos2_ref[...], sa2_ref[...], sb2_ref[...])
    k2r = _rotate_pairs(k2, cos2_ref[...], sa2_ref[...], sb2_ref[...])
    s2 = jnp.einsum('qd,kd->qk', q2r.astype(bf16), k2r.astype(bf16),
                    preferred_element_type=f32)                    # (C, C)
    s2 = s2 - jnp.max(s2, axis=-1, keepdims=True)
    e2 = jnp.exp(s2)
    p2 = e2 / jnp.sum(e2, axis=-1, keepdims=True)
    attn2 = jnp.dot(p2.astype(bf16), v2.astype(bf16),
                    preferred_element_type=f32)                    # (C, PL)
    y = xt + attn2

    # ---- rearrange 'c (p l) -> l (c p)' and store ----
    z = jnp.concatenate([y[:, pp * L:(pp + 1) * L] for pp in range(F)], axis=0)   # (D, L)
    o_ref[0] = jnp.dot(z.T, pb_ref[...], preferred_element_type=f32)              # (L, D)


# ----------------------------------------------------------------------------
# Wrapper
# ----------------------------------------------------------------------------
def rope_block_forward(x, params):
    B, L, D = x.shape
    p = params

    def full(a):
        return pl.BlockSpec(a.shape, lambda b, _nd=a.ndim: (0,) * _nd)

    operands = (x, p["scale"], p["w_qkv1"], p["w_proj"], p["bias"],
                p["cos1"], p["sinA1"], p["sinB1"],
                p["w_qkv2"], p["cos2"], p["sinA2"], p["sinB2"],
                p["perm_fwd"], p["perm_bwd"])

    weight_bytes = sum(int(a.size) * a.dtype.itemsize for a in operands[1:])
    block_bytes = L * D * 4
    vmem_limit = int(min(64 * 2 ** 20,
                         max(16 * 2 ** 20, 6 * (weight_bytes + 2 * block_bytes))))

    out = pl.pallas_call(
        rope_block_kernel,
        out_shape=jax.ShapeDtypeStruct((B, L, D), jnp.float32),
        grid=(B,),
        in_specs=[pl.BlockSpec((1, L, D), lambda b: (b, 0, 0))]
                 + [full(a) for a in operands[1:]],
        out_specs=pl.BlockSpec((1, L, D), lambda b: (b, 0, 0)),
        compiler_params=pltpu.CompilerParams(
            dimension_semantics=("parallel",),
            vmem_limit_bytes=vmem_limit),
    )(*operands)
    return out


# ----------------------------------------------------------------------------
# Parameter init (torch Linear shapes) + host-side preparation
# ----------------------------------------------------------------------------
def init_params(key, seq_len, dim, heads, factor=8):
    ks = jax.random.split(key, 8)
    b1 = 1.0 / np.sqrt(dim)
    wq = jax.random.uniform(ks[0], (heads, dim, dim), jnp.float32, -b1, b1)
    wk = jax.random.uniform(ks[1], (heads, dim, dim), jnp.float32, -b1, b1)
    wv = jax.random.uniform(ks[2], (heads, dim, dim), jnp.float32, -b1, b1)
    bp = 1.0 / np.sqrt(heads * dim)
    proj_w = jax.random.uniform(ks[3], (dim, heads * dim), jnp.float32, -bp, bp)
    proj_b = jax.random.uniform(ks[4], (dim,), jnp.float32, -bp, bp)
    d2 = seq_len * factor
    b2 = 1.0 / np.sqrt(d2)
    wq2 = jax.random.uniform(ks[5], (d2, d2), jnp.float32, -b2, b2)
    wk2 = jax.random.uniform(ks[6], (d2, d2), jnp.float32, -b2, b2)
    wv2 = jax.random.uniform(ks[7], (d2, d2), jnp.float32, -b2, b2)
    return dict(rms_scale=jnp.ones((seq_len, dim), jnp.float32),
                wq=wq, wk=wk, wv=wv, proj_w=proj_w, proj_b=proj_b,
                wq2=wq2, wk2=wk2, wv2=wv2)


def prepare_params(raw, seq_len, dim, heads, factor=8):
    L, D, H, F = seq_len, dim, heads, factor
    C, PL = D // F, L * F
    bf16 = jnp.bfloat16
    sm1 = 1.0 / np.sqrt(D)        # SDPA 1/sqrt(d), folded into the q projections
    sm2 = 1.0 / np.sqrt(PL)

    # fused (D, 3*H*D) projection; role-major columns [q_h0..q_h{H-1} | k_* | v_*]
    q_cols = [raw["wq"][h].T * sm1 for h in range(H)]
    k_cols = [raw["wk"][h].T for h in range(H)]
    v_cols = [raw["wv"][h].T for h in range(H)]
    w_qkv1 = jnp.concatenate(q_cols + k_cols + v_cols, axis=1).astype(bf16)
    w_proj = raw["proj_w"].T.astype(bf16)                     # (H*D, D)
    bias = raw["proj_b"].reshape(1, D).astype(jnp.float32)
    cos1, sinA1, sinB1 = rope_tables(L, D)

    w_qkv2 = jnp.concatenate([raw["wq2"].T * sm2, raw["wk2"].T, raw["wv2"].T],
                             axis=1).astype(bf16)             # (PL, 3*PL)
    cos2, sinA2, sinB2 = rope_tables(C, PL)

    perm_fwd = jnp.asarray(_rearrange_perm(D, F))             # (D, D) 0/1, exact in f32
    perm_bwd = perm_fwd.T

    return dict(scale=raw["rms_scale"], w_qkv1=w_qkv1, w_proj=w_proj, bias=bias,
                cos1=cos1, sinA1=sinA1, sinB1=sinB1,
                w_qkv2=w_qkv2, cos2=cos2, sinA2=sinA2, sinB2=sinB2,
                perm_fwd=perm_fwd, perm_bwd=perm_bwd)


if __name__ == "__main__":
    B, L, D, H = 2, 8, 32, 2       # batch, seq_len, dim, heads
    hidden_dim = 64                # unused by RoPEBlockNew.forward
    factor = 8
    key = jax.random.PRNGKey(0)
    kx, kp = jax.random.split(key)
    x = jax.random.normal(kx, (B, L, D), dtype=jnp.float32)
    params = prepare_params(init_params(kp, L, D, H, factor), L, D, H, factor)

    fwd = jax.jit(rope_block_forward)
    out = jax.block_until_ready(fwd(x, params))

    assert out.shape == (B, L, D)
    assert bool(jnp.all(jnp.isfinite(out)))
    print("KERNEL_OK")
</pallas_src>

<mosaic_0001>
module attributes {stable_mosaic.version = 11 : i64} {
  func.func @rope_block_kernel(%arg0: i32, %arg1: memref<1x8x32xf32, #tpu.memory_space<vmem>>, %arg2: memref<8x32xf32, #tpu.memory_space<vmem>>, %arg3: memref<32x192xbf16, #tpu.memory_space<vmem>>, %arg4: memref<64x32xbf16, #tpu.memory_space<vmem>>, %arg5: memref<1x32xf32, #tpu.memory_space<vmem>>, %arg6: memref<8x32xf32, #tpu.memory_space<vmem>>, %arg7: memref<8x32xf32, #tpu.memory_space<vmem>>, %arg8: memref<8x32xf32, #tpu.memory_space<vmem>>, %arg9: memref<64x192xbf16, #tpu.memory_space<vmem>>, %arg10: memref<4x64xf32, #tpu.memory_space<vmem>>, %arg11: memref<4x64xf32, #tpu.memory_space<vmem>>, %arg12: memref<4x64xf32, #tpu.memory_space<vmem>>, %arg13: memref<32x32xf32, #tpu.memory_space<vmem>>, %arg14: memref<32x32xf32, #tpu.memory_space<vmem>>, %arg15: memref<1x8x32xf32, #tpu.memory_space<vmem>>) attributes {dimension_semantics = [#tpu.dimension_semantics<parallel>], iteration_bounds = array<i64: 2>, scalar_prefetch = 0 : i64, scratch_operands = 0 : i64, tpu.core_type = #tpu.core_type<tc>, window_params = [{transform_indices = @transform_0, window_bounds = array<i64: 1, 8, 32>}, {pipeline_mode = #tpu.pipeline_mode<synchronous>, transform_indices = @transform_1, window_bounds = array<i64: 8, 32>}, {pipeline_mode = #tpu.pipeline_mode<synchronous>, transform_indices = @transform_2, window_bounds = array<i64: 32, 192>}, {pipeline_mode = #tpu.pipeline_mode<synchronous>, transform_indices = @transform_3, window_bounds = array<i64: 64, 32>}, {pipeline_mode = #tpu.pipeline_mode<synchronous>, transform_indices = @transform_4, window_bounds = array<i64: 1, 32>}, {pipeline_mode = #tpu.pipeline_mode<synchronous>, transform_indices = @transform_5, window_bounds = array<i64: 8, 32>}, {pipeline_mode = #tpu.pipeline_mode<synchronous>, transform_indices = @transform_6, window_bounds = array<i64: 8, 32>}, {pipeline_mode = #tpu.pipeline_mode<synchronous>, transform_indices = @transform_7, window_bounds = array<i64: 8, 32>}, {pipeline_mode = #tpu.pipeline_mode<synchronous>, transform_indices = @transform_8, window_bounds = array<i64: 64, 192>}, {pipeline_mode = #tpu.pipeline_mode<synchronous>, transform_indices = @transform_9, window_bounds = array<i64: 4, 64>}, {pipeline_mode = #tpu.pipeline_mode<synchronous>, transform_indices = @transform_10, window_bounds = array<i64: 4, 64>}, {pipeline_mode = #tpu.pipeline_mode<synchronous>, transform_indices = @transform_11, window_bounds = array<i64: 4, 64>}, {pipeline_mode = #tpu.pipeline_mode<synchronous>, transform_indices = @transform_12, window_bounds = array<i64: 32, 32>}, {pipeline_mode = #tpu.pipeline_mode<synchronous>, transform_indices = @transform_13, window_bounds = array<i64: 32, 32>}, {transform_indices = @transform_14, window_bounds = array<i64: 1, 8, 32>}]} {
    %c0 = arith.constant 0 : index
    %c0_0 = arith.constant 0 : index
    %c0_1 = arith.constant 0 : index
    %0 = vector.load %arg1[%c0, %c0_0, %c0_1] : memref<1x8x32xf32, #tpu.memory_space<vmem>>, vector<1x8x32xf32>
    %1 = vector.shape_cast %0 : vector<1x8x32xf32> to vector<8x32xf32>
    %c0_2 = arith.constant 0 : index
    %c0_3 = arith.constant 0 : index
    %2 = vector.load %arg2[%c0_2, %c0_3] : memref<8x32xf32, #tpu.memory_space<vmem>>, vector<8x32xf32>
    %3 = arith.mulf %1, %1 : vector<8x32xf32>
    %cst = arith.constant dense<0.000000e+00> : vector<8xf32>
    %4 = vector.multi_reduction <add>, %3, %cst [1] : vector<8x32xf32> to vector<8xf32>
    %5 = vector.shape_cast %4 : vector<8xf32> to vector<8x1xf32>
    %cst_4 = arith.constant dense<0.000000e+00> : vector<1xf32>
    %6 = vector.multi_reduction <add>, %5, %cst_4 [0] : vector<8x1xf32> to vector<1xf32>
    %7 = vector.shape_cast %6 : vector<1xf32> to vector<1x1xf32>
    %8 = math.rsqrt %7 : vector<1x1xf32>
    %cst_5 = arith.constant 1.600000e+01 : f32
    %9 = vector.broadcast %cst_5 : f32 to vector<1x1xf32>
    %10 = arith.mulf %8, %9 : vector<1x1xf32>
    %11 = vector.broadcast %10 : vector<1x1xf32> to vector<8x32xf32>
    %12 = arith.mulf %1, %11 : vector<8x32xf32>
    %13 = arith.mulf %2, %12 : vector<8x32xf32>
    %14 = arith.truncf %13 : vector<8x32xf32> to vector<8x32xbf16>
    %c0_6 = arith.constant 0 : index
    %c0_7 = arith.constant 0 : index
    %15 = vector.load %arg3[%c0_6, %c0_7] : memref<32x192xbf16, #tpu.memory_space<vmem>>, vector<32x192xbf16>
    %cst_8 = arith.constant dense<0.000000e+00> : vector<8x192xf32>
    %16 = tpu.matmul %14, %15, %cst_8 {dimension_numbers = #tpu.dot_dimension_numbers<[1], [0], [0], [1], [0, 0, 1, 1], [], []>} : vector<8x32xbf16>, vector<32x192xbf16>, vector<8x192xf32> -> vector<8x192xf32>
    %17 = vector.extract_strided_slice %16 {offsets = [0, 0], sizes = [8, 32], strides = [1, 1]} : vector<8x192xf32> to vector<8x32xf32>
    %18 = vector.extract_strided_slice %16 {offsets = [0, 32], sizes = [8, 32], strides = [1, 1]} : vector<8x192xf32> to vector<8x32xf32>
    %19 = vector.shape_cast %17 : vector<8x32xf32> to vector<1x8x32xf32>
    %20 = vector.shape_cast %18 : vector<8x32xf32> to vector<1x8x32xf32>
    %21 = tpu.concatenate %19, %20 in 0 : vector<1x8x32xf32>, vector<1x8x32xf32> -> vector<2x8x32xf32>
    %22 = vector.extract_strided_slice %16 {offsets = [0, 64], sizes = [8, 32], strides = [1, 1]} : vector<8x192xf32> to vector<8x32xf32>
    %23 = vector.extract_strided_slice %16 {offsets = [0, 96], sizes = [8, 32], strides = [1, 1]} : vector<8x192xf32> to vector<8x32xf32>
    %24 = vector.shape_cast %22 : vector<8x32xf32> to vector<1x8x32xf32>
    %25 = vector.shape_cast %23 : vector<8x32xf32> to vector<1x8x32xf32>
    %26 = tpu.concatenate %24, %25 in 0 : vector<1x8x32xf32>, vector<1x8x32xf32> -> vector<2x8x32xf32>
    %27 = vector.extract_strided_slice %16 {offsets = [0, 128], sizes = [8, 32], strides = [1, 1]} : vector<8x192xf32> to vector<8x32xf32>
    %28 = vector.extract_strided_slice %16 {offsets = [0, 160], sizes = [8, 32], strides = [1, 1]} : vector<8x192xf32> to vector<8x32xf32>
    %29 = vector.shape_cast %27 : vector<8x32xf32> to vector<1x8x32xf32>
    %30 = vector.shape_cast %28 : vector<8x32xf32> to vector<1x8x32xf32>
    %31 = tpu.concatenate %29, %30 in 0 : vector<1x8x32xf32>, vector<1x8x32xf32> -> vector<2x8x32xf32>
    %c0_9 = arith.constant 0 : index
    %c0_10 = arith.constant 0 : index
    %32 = vector.load %arg6[%c0_9, %c0_10] : memref<8x32xf32, #tpu.memory_space<vmem>>, vector<8x32xf32>
    %33 = vector.shape_cast %32 : vector<8x32xf32> to vector<1x8x32xf32>
    %34 = vector.broadcast %33 : vector<1x8x32xf32> to vector<2x8x32xf32>
    %c0_11 = arith.constant 0 : index
    %c0_12 = arith.constant 0 : index
    %35 = vector.load %arg7[%c0_11, %c0_12] : memref<8x32xf32, #tpu.memory_space<vmem>>, vector<8x32xf32>
    %36 = vector.shape_cast %35 : vector<8x32xf32> to vector<1x8x32xf32>
    %37 = vector.broadcast %36 : vector<1x8x32xf32> to vector<2x8x32xf32>
    %c0_13 = arith.constant 0 : index
    %c0_14 = arith.constant 0 : index
    %38 = vector.load %arg8[%c0_13, %c0_14] : memref<8x32xf32, #tpu.memory_space<vmem>>, vector<8x32xf32>
    %39 = vector.shape_cast %38 : vector<8x32xf32> to vector<1x8x32xf32>
    %40 = vector.broadcast %39 : vector<1x8x32xf32> to vector<2x8x32xf32>
    %41 = vector.extract_strided_slice %21 {offsets = [0, 0, 1], sizes = [2, 8, 31], strides = [1, 1, 1]} : vector<2x8x32xf32> to vector<2x8x31xf32>
    %42 = vector.extract_strided_slice %21 {offsets = [0, 0, 0], sizes = [2, 8, 1], strides = [1, 1, 1]} : vector<2x8x32xf32> to vector<2x8x1xf32>
    %43 = tpu.concatenate %41, %42 in 2 : vector<2x8x31xf32>, vector<2x8x1xf32> -> vector<2x8x32xf32>
    %44 = vector.extract_strided_slice %21 {offsets = [0, 0, 31], sizes = [2, 8, 1], strides = [1, 1, 1]} : vector<2x8x32xf32> to vector<2x8x1xf32>
    %45 = vector.extract_strided_slice %21 {offsets = [0, 0, 0], sizes = [2, 8, 31], strides = [1, 1, 1]} : vector<2x8x32xf32> to vector<2x8x31xf32>
    %46 = tpu.concatenate %44, %45 in 2 : vector<2x8x1xf32>, vector<2x8x31xf32> -> vector<2x8x32xf32>
    %47 = arith.mulf %21, %34 : vector<2x8x32xf32>
    %48 = arith.mulf %43, %37 : vector<2x8x32xf32>
    %49 = arith.addf %47, %48 : vector<2x8x32xf32>
    %50 = arith.mulf %46, %40 : vector<2x8x32xf32>
    %51 = arith.addf %49, %50 : vector<2x8x32xf32>
    %52 = vector.extract_strided_slice %26 {offsets = [0, 0, 1], sizes = [2, 8, 31], strides = [1, 1, 1]} : vector<2x8x32xf32> to vector<2x8x31xf32>
    %53 = vector.extract_strided_slice %26 {offsets = [0, 0, 0], sizes = [2, 8, 1], strides = [1, 1, 1]} : vector<2x8x32xf32> to vector<2x8x1xf32>
    %54 = tpu.concatenate %52, %53 in 2 : vector<2x8x31xf32>, vector<2x8x1xf32> -> vector<2x8x32xf32>
    %55 = vector.extract_strided_slice %26 {offsets = [0, 0, 31], sizes = [2, 8, 1], strides = [1, 1, 1]} : vector<2x8x32xf32> to vector<2x8x1xf32>
    %56 = vector.extract_strided_slice %26 {offsets = [0, 0, 0], sizes = [2, 8, 31], strides = [1, 1, 1]} : vector<2x8x32xf32> to vector<2x8x31xf32>
    %57 = tpu.concatenate %55, %56 in 2 : vector<2x8x1xf32>, vector<2x8x31xf32> -> vector<2x8x32xf32>
    %58 = arith.mulf %26, %34 : vector<2x8x32xf32>
    %59 = arith.mulf %54, %37 : vector<2x8x32xf32>
    %60 = arith.addf %58, %59 : vector<2x8x32xf32>
    %61 = arith.mulf %57, %40 : vector<2x8x32xf32>
    %62 = arith.addf %60, %61 : vector<2x8x32xf32>
    %63 = arith.truncf %51 : vector<2x8x32xf32> to vector<2x8x32xbf16>
    %64 = arith.truncf %62 : vector<2x8x32xf32> to vector<2x8x32xbf16>
    "tpu.trace_start"() <{level = 10 : i32, message = "hqd,hkd->hqk"}> : () -> ()
    %cst_15 = arith.constant dense<0.000000e+00> : vector<2x8x8xf32>
    %65 = tpu.matmul %63, %64, %cst_15 {dimension_numbers = #tpu.dot_dimension_numbers<[2], [2], [1], [1], [0, 0, 0, 1, 1, 1], [0], [0]>} : vector<2x8x32xbf16>, vector<2x8x32xbf16>, vector<2x8x8xf32> -> vector<2x8x8xf32>
    "tpu.trace_stop"() : () -> ()
    %cst_16 = arith.constant dense<0xFF800000> : vector<2x8xf32>
    %66 = vector.multi_reduction <maximumf>, %65, %cst_16 [2] : vector<2x8x8xf32> to vector<2x8xf32>
    %67 = vector.shape_cast %66 : vector<2x8xf32> to vector<2x8x1xf32>
    %68 = vector.broadcast %67 : vector<2x8x1xf32> to vector<2x8x8xf32>
    %69 = arith.subf %65, %68 : vector<2x8x8xf32>
    %70 = math.exp %69 : vector<2x8x8xf32>
    %cst_17 = arith.constant dense<0.000000e+00> : vector<2x8xf32>
    %71 = vector.multi_reduction <add>, %70, %cst_17 [2] : vector<2x8x8xf32> to vector<2x8xf32>
    %72 = vector.shape_cast %71 : vector<2x8xf32> to vector<2x8x1xf32>
    %73 = vector.broadcast %72 : vector<2x8x1xf32> to vector<2x8x8xf32>
    %74 = arith.divf %70, %73 : vector<2x8x8xf32>
    %75 = arith.truncf %74 : vector<2x8x8xf32> to vector<2x8x8xbf16>
    %76 = arith.truncf %31 : vector<2x8x32xf32> to vector<2x8x32xbf16>
    "tpu.trace_start"() <{level = 10 : i32, message = "hqk,hkd->hqd"}> : () -> ()
    %cst_18 = arith.constant dense<0.000000e+00> : vector<2x8x32xf32>
    %77 = tpu.matmul %75, %76, %cst_18 {dimension_numbers = #tpu.dot_dimension_numbers<[2], [1], [1], [2], [0, 0, 0, 1, 1, 2], [0], [0]>} : vector<2x8x8xbf16>, vector<2x8x32xbf16>, vector<2x8x32xf32> -> vector<2x8x32xf32>
    "tpu.trace_stop"() : () -> ()
    %78 = vector.extract_strided_slice %77 {offsets = [0, 0, 0], sizes = [1, 8, 32], strides = [1, 1, 1]} : vector<2x8x32xf32> to vector<1x8x32xf32>
    %79 = vector.shape_cast %78 : vector<1x8x32xf32> to vector<8x32xf32>
    %80 = vector.extract_strided_slice %77 {offsets = [1, 0, 0], sizes = [1, 8, 32], strides = [1, 1, 1]} : vector<2x8x32xf32> to vector<1x8x32xf32>
    %81 = vector.shape_cast %80 : vector<1x8x32xf32> to vector<8x32xf32>
    %82 = tpu.concatenate %79, %81 in 1 : vector<8x32xf32>, vector<8x32xf32> -> vector<8x64xf32>
    %83 = arith.truncf %82 : vector<8x64xf32> to vector<8x64xbf16>
    %c0_19 = arith.constant 0 : index
    %c0_20 = arith.constant 0 : index
    %84 = vector.load %arg4[%c0_19, %c0_20] : memref<64x32xbf16, #tpu.memory_space<vmem>>, vector<64x32xbf16>
    %cst_21 = arith.constant dense<0.000000e+00> : vector<8x32xf32>
    %85 = tpu.matmul %83, %84, %cst_21 {dimension_numbers = #tpu.dot_dimension_numbers<[1], [0], [0], [1], [0, 0, 1, 1], [], []>} : vector<8x64xbf16>, vector<64x32xbf16>, vector<8x32xf32> -> vector<8x32xf32>
    %c0_22 = arith.constant 0 : index
    %c0_23 = arith.constant 0 : index
    %86 = vector.load %arg5[%c0_22, %c0_23] : memref<1x32xf32, #tpu.memory_space<vmem>>, vector<1x32xf32>
    %87 = vector.broadcast %86 : vector<1x32xf32> to vector<8x32xf32>
    %88 = arith.addf %85, %87 : vector<8x32xf32>
    %89 = arith.addf %13, %88 : vector<8x32xf32>
    %90 = arith.mulf %89, %89 : vector<8x32xf32>
    %cst_24 = arith.constant dense<0.000000e+00> : vector<8xf32>
    %91 = vector.multi_reduction <add>, %90, %cst_24 [1] : vector<8x32xf32> to vector<8xf32>
    %92 = vector.shape_cast %91 : vector<8xf32> to vector<8x1xf32>
    %cst_25 = arith.constant dense<0.000000e+00> : vector<1xf32>
    %93 = vector.multi_reduction <add>, %92, %cst_25 [0] : vector<8x1xf32> to vector<1xf32>
    %94 = vector.shape_cast %93 : vector<1xf32> to vector<1x1xf32>
    %95 = math.rsqrt %94 : vector<1x1xf32>
    %cst_26 = arith.constant 1.600000e+01 : f32
    %96 = vector.broadcast %cst_26 : f32 to vector<1x1xf32>
    %97 = arith.mulf %95, %96 : vector<1x1xf32>
    %98 = vector.broadcast %97 : vector<1x1xf32> to vector<8x32xf32>
    %99 = arith.mulf %89, %98 : vector<8x32xf32>
    %100 = arith.mulf %2, %99 : vector<8x32xf32>
    %c0_27 = arith.constant 0 : index
    %c0_28 = arith.constant 0 : index
    %101 = vector.load %arg13[%c0_27, %c0_28] : memref<32x32xf32, #tpu.memory_space<vmem>>, vector<32x32xf32>
    %cst_29 = arith.constant dense<0.000000e+00> : vector<8x32xf32>
    %102 = tpu.matmul %100, %101, %cst_29 {dimension_numbers = #tpu.dot_dimension_numbers<[1], [0], [0], [1], [0, 0, 1, 1], [], []>} : vector<8x32xf32>, vector<32x32xf32>, vector<8x32xf32> -> vector<8x32xf32>
    %103 = vector.extract_strided_slice %102 {offsets = [0, 0], sizes = [8, 4], strides = [1, 1]} : vector<8x32xf32> to vector<8x4xf32>
    %104 = vector.extract_strided_slice %102 {offsets = [0, 4], sizes = [8, 4], strides = [1, 1]} : vector<8x32xf32> to vector<8x4xf32>
    %105 = vector.extract_strided_slice %102 {offsets = [0, 8], sizes = [8, 4], strides = [1, 1]} : vector<8x32xf32> to vector<8x4xf32>
    %106 = vector.extract_strided_slice %102 {offsets = [0, 12], sizes = [8, 4], strides = [1, 1]} : vector<8x32xf32> to vector<8x4xf32>
    %107 = vector.extract_strided_slice %102 {offsets = [0, 16], sizes = [8, 4], strides = [1, 1]} : vector<8x32xf32> to vector<8x4xf32>
    %108 = vector.extract_strided_slice %102 {offsets = [0, 20], sizes = [8, 4], strides = [1, 1]} : vector<8x32xf32> to vector<8x4xf32>
    %109 = vector.extract_strided_slice %102 {offsets = [0, 24], sizes = [8, 4], strides = [1, 1]} : vector<8x32xf32> to vector<8x4xf32>
    %110 = vector.extract_strided_slice %102 {offsets = [0, 28], sizes = [8, 4], strides = [1, 1]} : vector<8x32xf32> to vector<8x4xf32>
    %111 = tpu.concatenate %103, %104, %105, %106, %107, %108, %109, %110 in 0 : vector<8x4xf32>, vector<8x4xf32>, vector<8x4xf32>, vector<8x4xf32>, vector<8x4xf32>, vector<8x4xf32>, vector<8x4xf32>, vector<8x4xf32> -> vector<64x4xf32>
    %112 = tpu.transpose %111, [1, 0] : vector<64x4xf32> -> vector<4x64xf32>
    %113 = arith.truncf %112 : vector<4x64xf32> to vector<4x64xbf16>
    %c0_30 = arith.constant 0 : index
    %c0_31 = arith.constant 0 : index
    %114 = vector.load %arg9[%c0_30, %c0_31] : memref<64x192xbf16, #tpu.memory_space<vmem>>, vector<64x192xbf16>
    %cst_32 = arith.constant dense<0.000000e+00> : vector<4x192xf32>
    %115 = tpu.matmul %113, %114, %cst_32 {dimension_numbers = #tpu.dot_dimension_numbers<[1], [0], [0], [1], [0, 0, 1, 1], [], []>} : vector<4x64xbf16>, vector<64x192xbf16>, vector<4x192xf32> -> vector<4x192xf32>
    %116 = vector.extract_strided_slice %115 {offsets = [0, 0], sizes = [4, 64], strides = [1, 1]} : vector<4x192xf32> to vector<4x64xf32>
    %117 = vector.extract_strided_slice %115 {offsets = [0, 64], sizes = [4, 64], strides = [1, 1]} : vector<4x192xf32> to vector<4x64xf32>
    %118 = vector.extract_strided_slice %115 {offsets = [0, 128], sizes = [4, 64], strides = [1, 1]} : vector<4x192xf32> to vector<4x64xf32>
    %c0_33 = arith.constant 0 : index
    %c0_34 = arith.constant 0 : index
    %119 = vector.load %arg10[%c0_33, %c0_34] : memref<4x64xf32, #tpu.memory_space<vmem>>, vector<4x64xf32>
    %c0_35 = arith.constant 0 : index
    %c0_36 = arith.constant 0 : index
    %120 = vector.load %arg11[%c0_35, %c0_36] : memref<4x64xf32, #tpu.memory_space<vmem>>, vector<4x64xf32>
    %c0_37 = arith.constant 0 : index
    %c0_38 = arith.constant 0 : index
    %121 = vector.load %arg12[%c0_37, %c0_38] : memref<4x64xf32, #tpu.memory_space<vmem>>, vector<4x64xf32>
    %122 = vector.extract_strided_slice %116 {offsets = [0, 1], sizes = [4, 63], strides = [1, 1]} : vector<4x64xf32> to vector<4x63xf32>
    %123 = vector.extract_strided_slice %116 {offsets = [0, 0], sizes = [4, 1], strides = [1, 1]} : vector<4x64xf32> to vector<4x1xf32>
    %124 = tpu.concatenate %122, %123 in 1 : vector<4x63xf32>, vector<4x1xf32> -> vector<4x64xf32>
    %125 = vector.extract_strided_slice %116 {offsets = [0, 63], sizes = [4, 1], strides = [1, 1]} : vector<4x64xf32> to vector<4x1xf32>
    %126 = vector.extract_strided_slice %116 {offsets = [0, 0], sizes = [4, 63], strides = [1, 1]} : vector<4x64xf32> to vector<4x63xf32>
    %127 = tpu.concatenate %125, %126 in 1 : vector<4x1xf32>, vector<4x63xf32> -> vector<4x64xf32>
    %128 = arith.mulf %116, %119 : vector<4x64xf32>
    %129 = arith.mulf %124, %120 : vector<4x64xf32>
    %130 = arith.addf %128, %129 : vector<4x64xf32>
    %131 = arith.mulf %127, %121 : vector<4x64xf32>
    %132 = arith.addf %130, %131 : vector<4x64xf32>
    %c0_39 = arith.constant 0 : index
    %c0_40 = arith.constant 0 : index
    %133 = vector.load %arg10[%c0_39, %c0_40] : memref<4x64xf32, #tpu.memory_space<vmem>>, vector<4x64xf32>
    %c0_41 = arith.constant 0 : index
    %c0_42 = arith.constant 0 : index
    %134 = vector.load %arg11[%c0_41, %c0_42] : memref<4x64xf32, #tpu.memory_space<vmem>>, vector<4x64xf32>
    %c0_43 = arith.constant 0 : index
    %c0_44 = arith.constant 0 : index
    %135 = vector.load %arg12[%c0_43, %c0_44] : memref<4x64xf32, #tpu.memory_space<vmem>>, vector<4x64xf32>
    %136 = vector.extract_strided_slice %117 {offsets = [0, 1], sizes = [4, 63], strides = [1, 1]} : vector<4x64xf32> to vector<4x63xf32>
    %137 = vector.extract_strided_slice %117 {offsets = [0, 0], sizes = [4, 1], strides = [1, 1]} : vector<4x64xf32> to vector<4x1xf32>
    %138 = tpu.concatenate %136, %137 in 1 : vector<4x63xf32>, vector<4x1xf32> -> vector<4x64xf32>
    %139 = vector.extract_strided_slice %117 {offsets = [0, 63], sizes = [4, 1], strides = [1, 1]} : vector<4x64xf32> to vector<4x1xf32>
    %140 = vector.extract_strided_slice %117 {offsets = [0, 0], sizes = [4, 63], strides = [1, 1]} : vector<4x64xf32> to vector<4x63xf32>
    %141 = tpu.concatenate %139, %140 in 1 : vector<4x1xf32>, vector<4x63xf32> -> vector<4x64xf32>
    %142 = arith.mulf %117, %133 : vector<4x64xf32>
    %143 = arith.mulf %138, %134 : vector<4x64xf32>
    %144 = arith.addf %142, %143 : vector<4x64xf32>
    %145 = arith.mulf %141, %135 : vector<4x64xf32>
    %146 = arith.addf %144, %145 : vector<4x64xf32>
    %147 = arith.truncf %132 : vector<4x64xf32> to vector<4x64xbf16>
    %148 = arith.truncf %146 : vector<4x64xf32> to vector<4x64xbf16>
    "tpu.trace_start"() <{level = 10 : i32, message = "qd,kd->qk"}> : () -> ()
    %cst_45 = arith.constant dense<0.000000e+00> : vector<4x4xf32>
    %149 = tpu.matmul %147, %148, %cst_45 {dimension_numbers = #tpu.dot_dimension_numbers<[1], [1], [0], [0], [0, 0, 1, 0], [], []>} : vector<4x64xbf16>, vector<4x64xbf16>, vector<4x4xf32> -> vector<4x4xf32>
    "tpu.trace_stop"() : () -> ()
    %cst_46 = arith.constant dense<0xFF800000> : vector<4xf32>
    %150 = vector.multi_reduction <maximumf>, %149, %cst_46 [1] : vector<4x4xf32> to vector<4xf32>
    %151 = vector.shape_cast %150 : vector<4xf32> to vector<4x1xf32>
    %152 = vector.broadcast %151 : vector<4x1xf32> to vector<4x4xf32>
    %153 = arith.subf %149, %152 : vector<4x4xf32>
    %154 = math.exp %153 : vector<4x4xf32>
    %cst_47 = arith.constant dense<0.000000e+00> : vector<4xf32>
    %155 = vector.multi_reduction <add>, %154, %cst_47 [1] : vector<4x4xf32> to vector<4xf32>
    %156 = vector.shape_cast %155 : vector<4xf32> to vector<4x1xf32>
    %157 = vector.broadcast %156 : vector<4x1xf32> to vector<4x4xf32>
    %158 = arith.divf %154, %157 : vector<4x4xf32>
    %159 = arith.truncf %158 : vector<4x4xf32> to vector<4x4xbf16>
    %160 = arith.truncf %118 : vector<4x64xf32> to vector<4x64xbf16>
    %cst_48 = arith.constant dense<0.000000e+00> : vector<4x64xf32>
    %161 = tpu.matmul %159, %160, %cst_48 {dimension_numbers = #tpu.dot_dimension_numbers<[1], [0], [0], [1], [0, 0, 1, 1], [], []>} : vector<4x4xbf16>, vector<4x64xbf16>, vector<4x64xf32> -> vector<4x64xf32>
    %162 = arith.addf %112, %161 : vector<4x64xf32>
    %163 = vector.extract_strided_slice %162 {offsets = [0, 0], sizes = [4, 8], strides = [1, 1]} : vector<4x64xf32> to vector<4x8xf32>
    %164 = vector.extract_strided_slice %162 {offsets = [0, 8], sizes = [4, 8], strides = [1, 1]} : vector<4x64xf32> to vector<4x8xf32>
    %165 = vector.extract_strided_slice %162 {offsets = [0, 16], sizes = [4, 8], strides = [1, 1]} : vector<4x64xf32> to vector<4x8xf32>
    %166 = vector.extract_strided_slice %162 {offsets = [0, 24], sizes = [4, 8], strides = [1, 1]} : vector<4x64xf32> to vector<4x8xf32>
    %167 = vector.extract_strided_slice %162 {offsets = [0, 32], sizes = [4, 8], strides = [1, 1]} : vector<4x64xf32> to vector<4x8xf32>
    %168 = vector.extract_strided_slice %162 {offsets = [0, 40], sizes = [4, 8], strides = [1, 1]} : vector<4x64xf32> to vector<4x8xf32>
    %169 = vector.extract_strided_slice %162 {offsets = [0, 48], sizes = [4, 8], strides = [1, 1]} : vector<4x64xf32> to vector<4x8xf32>
    %170 = vector.extract_strided_slice %162 {offsets = [0, 56], sizes = [4, 8], strides = [1, 1]} : vector<4x64xf32> to vector<4x8xf32>
    %171 = tpu.concatenate %163, %164, %165, %166, %167, %168, %169, %170 in 0 : vector<4x8xf32>, vector<4x8xf32>, vector<4x8xf32>, vector<4x8xf32>, vector<4x8xf32>, vector<4x8xf32>, vector<4x8xf32>, vector<4x8xf32> -> vector<32x8xf32>
    %172 = tpu.transpose %171, [1, 0] : vector<32x8xf32> -> vector<8x32xf32>
    %c0_49 = arith.constant 0 : index
    %c0_50 = arith.constant 0 : index
    %173 = vector.load %arg14[%c0_49, %c0_50] : memref<32x32xf32, #tpu.memory_space<vmem>>, vector<32x32xf32>
    %cst_51 = arith.constant dense<0.000000e+00> : vector<8x32xf32>
    %174 = tpu.matmul %172, %173, %cst_51 {dimension_numbers = #tpu.dot_dimension_numbers<[1], [0], [0], [1], [0, 0, 1, 1], [], []>} : vector<8x32xf32>, vector<32x32xf32>, vector<8x32xf32> -> vector<8x32xf32>
    %c0_52 = arith.constant 0 : index
    %c0_53 = arith.constant 0 : index
    %c0_54 = arith.constant 0 : index
    %175 = vector.load %arg15[%c0_52, %c0_53, %c0_54] : memref<1x8x32xf32, #tpu.memory_space<vmem>>, vector<1x8x32xf32>
    %176 = vector.shape_cast %175 : vector<1x8x32xf32> to vector<8x32xf32>
    %177 = vector.shape_cast %174 : vector<8x32xf32> to vector<1x8x32xf32>
    tpu.vector_store %arg15[%c0_52, %c0_53, %c0_54], %177 {strides = array<i32>} : memref<1x8x32xf32, #tpu.memory_space<vmem>>, vector<1x8x32xf32>,
    return
  }
  func.func @transform_0(%arg0: i32) -> (i32, i32, i32) {
    %c0_i32 = arith.constant 0 : i32
    %c0_i32_0 = arith.constant 0 : i32
    %c0_i32_1 = arith.constant 0 : i32
    return %arg0, %c0_i32, %c0_i32_0 : i32, i32, i32
  }
  func.func @transform_1(%arg0: i32) -> (i32, i32) {
    %c0_i32 = arith.constant 0 : i32
    %c0_i32_0 = arith.constant 0 : i32
    %c0_i32_1 = arith.constant 0 : i32
    return %c0_i32, %c0_i32_0 : i32, i32
  }
  func.func @transform_2(%arg0: i32) -> (i32, i32) {
    %c0_i32 = arith.constant 0 : i32
    %c0_i32_0 = arith.constant 0 : i32
    %c0_i32_1 = arith.constant 0 : i32
    return %c0_i32, %c0_i32_0 : i32, i32
  }
  func.func @transform_3(%arg0: i32) -> (i32, i32) {
    %c0_i32 = arith.constant 0 : i32
    %c0_i32_0 = arith.constant 0 : i32
    %c0_i32_1 = arith.constant 0 : i32
    return %c0_i32, %c0_i32_0 : i32, i32
  }
  func.func @transform_4(%arg0: i32) -> (i32, i32) {
    %c0_i32 = arith.constant 0 : i32
    %c0_i32_0 = arith.constant 0 : i32
    %c0_i32_1 = arith.constant 0 : i32
    return %c0_i32, %c0_i32_0 : i32, i32
  }
  func.func @transform_5(%arg0: i32) -> (i32, i32) {
    %c0_i32 = arith.constant 0 : i32
    %c0_i32_0 = arith.constant 0 : i32
    %c0_i32_1 = arith.constant 0 : i32
    return %c0_i32, %c0_i32_0 : i32, i32
  }
  func.func @transform_6(%arg0: i32) -> (i32, i32) {
    %c0_i32 = arith.constant 0 : i32
    %c0_i32_0 = arith.constant 0 : i32
    %c0_i32_1 = arith.constant 0 : i32
    return %c0_i32, %c0_i32_0 : i32, i32
  }
  func.func @transform_7(%arg0: i32) -> (i32, i32) {
    %c0_i32 = arith.constant 0 : i32
    %c0_i32_0 = arith.constant 0 : i32
    %c0_i32_1 = arith.constant 0 : i32
    return %c0_i32, %c0_i32_0 : i32, i32
  }
  func.func @transform_8(%arg0: i32) -> (i32, i32) {
    %c0_i32 = arith.constant 0 : i32
    %c0_i32_0 = arith.constant 0 : i32
    %c0_i32_1 = arith.constant 0 : i32
    return %c0_i32, %c0_i32_0 : i32, i32
  }
  func.func @transform_9(%arg0: i32) -> (i32, i32) {
    %c0_i32 = arith.constant 0 : i32
    %c0_i32_0 = arith.constant 0 : i32
    %c0_i32_1 = arith.constant 0 : i32
    return %c0_i32, %c0_i32_0 : i32, i32
  }
  func.func @transform_10(%arg0: i32) -> (i32, i32) {
    %c0_i32 = arith.constant 0 : i32
    %c0_i32_0 = arith.constant 0 : i32
    %c0_i32_1 = arith.constant 0 : i32
    return %c0_i32, %c0_i32_0 : i32, i32
  }
  func.func @transform_11(%arg0: i32) -> (i32, i32) {
    %c0_i32 = arith.constant 0 : i32
    %c0_i32_0 = arith.constant 0 : i32
    %c0_i32_1 = arith.constant 0 : i32
    return %c0_i32, %c0_i32_0 : i32, i32
  }
  func.func @transform_12(%arg0: i32) -> (i32, i32) {
    %c0_i32 = arith.constant 0 : i32
    %c0_i32_0 = arith.constant 0 : i32
    %c0_i32_1 = arith.constant 0 : i32
    return %c0_i32, %c0_i32_0 : i32, i32
  }
  func.func @transform_13(%arg0: i32) -> (i32, i32) {
    %c0_i32 = arith.constant 0 : i32
    %c0_i32_0 = arith.constant 0 : i32
    %c0_i32_1 = arith.constant 0 : i32
    return %c0_i32, %c0_i32_0 : i32, i32
  }
  func.func @transform_14(%arg0: i32) -> (i32, i32, i32) {
    %c0_i32 = arith.constant 0 : i32
    %c0_i32_0 = arith.constant 0 : i32
    %c0_i32_1 = arith.constant 0 : i32
    return %arg0, %c0_i32, %c0_i32_0 : i32, i32, i32
  }
}

</mosaic_0001>

<llo_original>
// kernel: rope_block_forward.1
$region0: #{rope_block_forward.1}
  #allocation0 [shape = 'u32[]', space=smem, size = 0x4, offset = 0x4, fixed_abs, tag = 'smem constant byte address 0x4 - core index']
  #allocation1 [shape = 'u32[72,128]{1,0:T(1,128)}', space=vmem, size = 0x9000, scoped, tag = 'internal scratch']
  %s0 = inlined_call_operand.vmem [shape: f32[2,8,32], index: 0, kind: input, shape index: {}]
  %s1 = inlined_call_operand.vmem [shape: f32[8,32], index: 1, kind: input, shape index: {}]
  %s2 = inlined_call_operand.vmem [shape: bf16[32,192], index: 2, kind: input, shape index: {}]
  %s3 = inlined_call_operand.vmem [shape: bf16[64,32], index: 3, kind: input, shape index: {}]
  %s4 = inlined_call_operand.vmem [shape: f32[1,32], index: 4, kind: input, shape index: {}]
  %s5 = inlined_call_operand.hbm [shape: f32[8,32], index: 5, kind: input, shape index: {}]
  %s6 = inlined_call_operand.hbm [shape: f32[8,32], index: 6, kind: input, shape index: {}]
  %s7 = inlined_call_operand.hbm [shape: f32[8,32], index: 7, kind: input, shape index: {}]
  %s8 = inlined_call_operand.hbm [shape: bf16[64,192], index: 8, kind: input, shape index: {}]
  %s9 = inlined_call_operand.hbm [shape: f32[4,64], index: 9, kind: input, shape index: {}]
  %s10 = inlined_call_operand.hbm [shape: f32[4,64], index: 10, kind: input, shape index: {}]
  %s11 = inlined_call_operand.hbm [shape: f32[4,64], index: 11, kind: input, shape index: {}]
  %s12 = inlined_call_operand.hbm [shape: f32[32,32], index: 12, kind: input, shape index: {}]
  %s13 = inlined_call_operand.hbm [shape: f32[32,32], index: 13, kind: input, shape index: {}]
  %s14 = inlined_call_operand.hbm [shape: f32[2,8,32], index: 14, kind: output, shape index: {}]
  %s15 = sld [smem:[#allocation0]]
  $region125: #{rope_block_forward.1} parent=0
    _
  %s17 = ssub.s32 1, %s15
  %s18 = scalar_select 0, %s17, %s15
  $region1: #{rope_block_forward.1} parent=0
    #allocation2 [shape = 'u8[4096]{0}', space=vmem, size = 0x1000, scoped, tag = 'input window, operand 5, single buffered']
    #allocation3 [shape = 's32[2]{0}', space=sflag, size = 0x8, scoped, tag = 'scoped memory for rope_block_forward.1']
    #allocation4 [shape = 's32[2]{0}', space=sflag, size = 0x8, scoped, tag = 'scoped memory for rope_block_forward.1']
    #allocation5 [shape = 'u8[4096]{0}', space=vmem, size = 0x1000, scoped, tag = 'input window, operand 6, single buffered']
    #allocation6 [shape = 's32[1]{0}', space=sflag, size = 0x4, scoped, tag = 'scoped memory for rope_block_forward.1']
    #allocation7 [shape = 'u8[4096]{0}', space=vmem, size = 0x1000, scoped, tag = 'input window, operand 7, single buffered']
    #allocation8 [shape = 'u8[32768]{0}', space=vmem, size = 0x8000, scoped, tag = 'input window, operand 8, single buffered']
    #allocation9 [shape = 's32[1]{0}', space=sflag, size = 0x4, scoped, tag = 'scoped memory for rope_block_forward.1']
    #allocation10 [shape = 'u8[2048]{0}', space=vmem, size = 0x800, scoped, tag = 'input window, operand 9, single buffered']
    #allocation11 [shape = 'u8[2048]{0}', space=vmem, size = 0x800, scoped, tag = 'input window, operand 10, single buffered']
    #allocation12 [shape = 's32[1]{0}', space=sflag, size = 0x4, scoped, tag = 'scoped memory for rope_block_forward.1']
    #allocation13 [shape = 'u8[2048]{0}', space=vmem, size = 0x800, scoped, tag = 'input window, operand 11, single buffered']
    #allocation14 [shape = 'u8[16384]{0}', space=vmem, size = 0x4000, scoped, tag = 'input window, operand 12, single buffered']
    #allocation15 [shape = 's32[1]{0}', space=sflag, size = 0x4, scoped, tag = 'scoped memory for rope_block_forward.1']
    #allocation16 [shape = 'u8[16384]{0}', space=vmem, size = 0x4000, scoped, tag = 'input window, operand 13, single buffered']
    #allocation17 [shape = 'u8[8192]{0}', space=vmem, size = 0x2000, scoped, tag = 'output window, operand 0']
    %19 = vsyncpa [#allocation3], 0
    %20 = vsyncpa [#allocation6], 0
    %21 = vsyncpa [#allocation9], 0
    %22 = vsyncpa [#allocation12], 0
    %23 = vsyncpa [#allocation15], 0
    %24 = vsyncpa [#allocation4], 0
    %s25 = scalar_lea.sflag [#allocation4], 1
    %26 = vsyncpa %s25, 0
    loop: start=0, step=1, limit=4
    $region2: #{rope_block_forward.1} parent=1 // loop_pre_header
      _
    $region3: #{rope_block_forward.1} parent=1 // loop_header
      %s28 = sphi 0, %s32
      %p29 = scmp.ge.s32.totalorder %s28, 4
      %s38 = sphi 0, %s40
      %s41 = sphi 0, %s38
      %s42 = sphi 0, %s41
      %s58 = sphi 0, %s42
      %s62 = sphi 0, %s62
      %s64 = sphi 0, %s62
      %s65 = sphi 0, %s64
      %s79 = sphi 0, %s65
      %s83 = sphi 0, %s83
      %s85 = sphi 0, %s83
      %s86 = sphi 0, %s85
      %s100 = sphi 0, %s86
      %s104 = sphi 0, %s104
      %s106 = sphi 0, %s104
      %s107 = sphi 0, %s106
      %s121 = sphi 0, %s107
      %s125 = sphi 0, %s125
      %s127 = sphi 0, %s125
      %s128 = sphi 0, %s127
      %s142 = sphi 0, %s128
      %s146 = sphi 0, %s146
      %s148 = sphi 0, %s146
      %s149 = sphi 0, %s148
      %s163 = sphi 0, %s149
      %s167 = sphi 0, %s167
      %s169 = sphi 0, %s167
      %s170 = sphi 0, %s169
      %s184 = sphi 0, %s170
      %s188 = sphi 0, %s188
      %s190 = sphi 0, %s188
      %s191 = sphi 0, %s190
      %s205 = sphi 0, %s191
      %s209 = sphi 0, %s209
      %s211 = sphi 0, %s209
      %s212 = sphi 0, %s211
      %s226 = sphi 0, %s212
      %s230 = sphi 0, %s230
      %s232 = sphi 0, %s230
      %s233 = sphi 0, %s232
      %s247 = sphi 0, %s233
      %s251 = sphi 0, %s251
      %s253 = sphi 0, %s251
      %s254 = sphi 0, %s253
      %s268 = sphi 0, %s254
      %s272 = sphi 0, %s272
      %s274 = sphi 0, %s272
      %s275 = sphi 0, %s274
      %s289 = sphi 0, %s275
      %s293 = sphi 0, %s293
      %s295 = sphi 0, %s293
      %s296 = sphi 0, %s295
      %s310 = sphi 0, %s296
      %s314 = sphi 0, %s314
      %s316 = sphi 0, %s314
      %s317 = sphi 0, %s316
      %s331 = sphi 0, %s317
      %s337 = sphi 0, %s339
      %s340 = sphi 0, %s337
      %s341 = sphi 0, %s340
      %s357 = sphi 0, %s341
    $region4: #{rope_block_forward.1} parent=1 // loop_header_branch
      %31 = sbr.rel (%p29) target = $region8
    $region5: #{rope_block_forward.1} parent=1 // loop_body
      %s33 = ssub.s32 %s28, 1
      %s34 = ssub.s32 %s28, 2
      %s35 = sadd.s32 %s28, 1
      %s36 = ssub.s32 %s28, %s35
      %p37 = scmp.eq.s32.totalorder %s36, 0
      %s39 = sadd.s32 %s38, 1
      %s40 = scalar_select %p37, %s38, %s39
      %p43 = pneg %p37
      %p44 = scmp.eq.s32.totalorder %s28, 1
      %p45 = por %p43, %p44
      %p46 = scmp.ne.s32.totalorder %s38, %s41
      %p47 = scmp.eq.s32.totalorder %s28, 0
      %p48 = por %p46, %p47
      %p49 = scmp.ne.s32.totalorder %s38, %s41
      %p50 = scmp.eq.s32.totalorder %s33, 1
      %p51 = por %p49, %p50
      %p52 = scmp.ne.s32.totalorder %s41, %s42
      %p53 = scmp.eq.s32.totalorder %s33, 0
      %p54 = por %p52, %p53
      %p55 = scmp.ne.s32.totalorder %s41, %s42
      %p56 = scmp.eq.s32.totalorder %s34, 1
      %p57 = por %p55, %p56
      %p59 = scmp.ne.s32.totalorder %s42, %s58
      %p60 = scmp.eq.s32.totalorder %s34, 0
      %p61 = por %p59, %p60
      %s63 = sadd.s32 %s62, 1
      %p66 = scmp.eq.s32.totalorder %s28, 1
      %p67 = scmp.ne.s32.totalorder %s62, %s64
      %p68 = scmp.eq.s32.totalorder %s28, 0
      %p69 = por %p67, %p68
      %p70 = scmp.ne.s32.totalorder %s62, %s64
      %p71 = scmp.eq.s32.totalorder %s33, 1
      %p72 = por %p70, %p71
      %p73 = scmp.ne.s32.totalorder %s64, %s65
      %p74 = scmp.eq.s32.totalorder %s33, 0
      %p75 = por %p73, %p74
      %p76 = scmp.ne.s32.totalorder %s64, %s65
      %p77 = scmp.eq.s32.totalorder %s34, 1
      %p78 = por %p76, %p77
      %p80 = scmp.ne.s32.totalorder %s65, %s79
      %p81 = scmp.eq.s32.totalorder %s34, 0
      %p82 = por %p80, %p81
      %s84 = sadd.s32 %s83, 1
      %p87 = scmp.eq.s32.totalorder %s28, 1
      %p88 = scmp.ne.s32.totalorder %s83, %s85
      %p89 = scmp.eq.s32.totalorder %s28, 0
      %p90 = por %p88, %p89
      %p91 = scmp.ne.s32.totalorder %s83, %s85
      %p92 = scmp.eq.s32.totalorder %s33, 1
      %p93 = por %p91, %p92
      %p94 = scmp.ne.s32.totalorder %s85, %s86
      %p95 = scmp.eq.s32.totalorder %s33, 0
      %p96 = por %p94, %p95
      %p97 = scmp.ne.s32.totalorder %s85, %s86
      %p98 = scmp.eq.s32.totalorder %s34, 1
      %p99 = por %p97, %p98
      %p101 = scmp.ne.s32.totalorder %s86, %s100
      %p102 = scmp.eq.s32.totalorder %s34, 0
      %p103 = por %p101, %p102
      %s105 = sadd.s32 %s104, 1
      %p108 = scmp.eq.s32.totalorder %s28, 1
      %p109 = scmp.ne.s32.totalorder %s104, %s106
      %p110 = scmp.eq.s32.totalorder %s28, 0
      %p111 = por %p109, %p110
      %p112 = scmp.ne.s32.totalorder %s104, %s106
      %p113 = scmp.eq.s32.totalorder %s33, 1
      %p114 = por %p112, %p113
      %p115 = scmp.ne.s32.totalorder %s106, %s107
      %p116 = scmp.eq.s32.totalorder %s33, 0
      %p117 = por %p115, %p116
      %p118 = scmp.ne.s32.totalorder %s106, %s107
      %p119 = scmp.eq.s32.totalorder %s34, 1
      %p120 = por %p118, %p119
      %p122 = scmp.ne.s32.totalorder %s107, %s121
      %p123 = scmp.eq.s32.totalorder %s34, 0
      %p124 = por %p122, %p123
      %s126 = sadd.s32 %s125, 1
      %p129 = scmp.eq.s32.totalorder %s28, 1
      %p130 = scmp.ne.s32.totalorder %s125, %s127
      %p131 = scmp.eq.s32.totalorder %s28, 0
      %p132 = por %p130, %p131
      %p133 = scmp.ne.s32.totalorder %s125, %s127
      %p134 = scmp.eq.s32.totalorder %s33, 1
      %p135 = por %p133, %p134
      %p136 = scmp.ne.s32.totalorder %s127, %s128
      %p137 = scmp.eq.s32.totalorder %s33, 0
      %p138 = por %p136, %p137
      %p139 = scmp.ne.s32.totalorder %s127, %s128
      %p140 = scmp.eq.s32.totalorder %s34, 1
      %p141 = por %p139, %p140
      %p143 = scmp.ne.s32.totalorder %s128, %s142
      %p144 = scmp.eq.s32.totalorder %s34, 0
      %p145 = por %p143, %p144
      %s147 = sadd.s32 %s146, 1
      %p150 = scmp.eq.s32.totalorder %s28, 1
      %p151 = scmp.ne.s32.totalorder %s146, %s148
      %p152 = scmp.eq.s32.totalorder %s28, 0
      %p153 = por %p151, %p152
      %p154 = scmp.ne.s32.totalorder %s146, %s148
      %p155 = scmp.eq.s32.totalorder %s33, 1
      %p156 = por %p154, %p155
      %p157 = scmp.ne.s32.totalorder %s148, %s149
      %p158 = scmp.eq.s32.totalorder %s33, 0
      %p159 = por %p157, %p158
      %p160 = scmp.ne.s32.totalorder %s148, %s149
      %p161 = scmp.eq.s32.totalorder %s34, 1
      %p162 = por %p160, %p161
      %p164 = scmp.ne.s32.totalorder %s149, %s163
      %p165 = scmp.eq.s32.totalorder %s34, 0
      %p166 = por %p164, %p165
      %s168 = sadd.s32 %s167, 1
      %p171 = scmp.eq.s32.totalorder %s28, 1
      %p172 = scmp.ne.s32.totalorder %s167, %s169
      %p173 = scmp.eq.s32.totalorder %s28, 0
      %p174 = por %p172, %p173
      %p175 = scmp.ne.s32.totalorder %s167, %s169
      %p176 = scmp.eq.s32.totalorder %s33, 1
      %p177 = por %p175, %p176
      %p178 = scmp.ne.s32.totalorder %s169, %s170
      %p179 = scmp.eq.s32.totalorder %s33, 0
      %p180 = por %p178, %p179
      %p181 = scmp.ne.s32.totalorder %s169, %s170
      %p182 = scmp.eq.s32.totalorder %s34, 1
      %p183 = por %p181, %p182
      %p185 = scmp.ne.s32.totalorder %s170, %s184
      %p186 = scmp.eq.s32.totalorder %s34, 0
      %p187 = por %p185, %p186
      %s189 = sadd.s32 %s188, 1
      %p192 = scmp.eq.s32.totalorder %s28, 1
      %p193 = scmp.ne.s32.totalorder %s188, %s190
      %p194 = scmp.eq.s32.totalorder %s28, 0
      %p195 = por %p193, %p194
      %p196 = scmp.ne.s32.totalorder %s188, %s190
      %p197 = scmp.eq.s32.totalorder %s33, 1
      %p198 = por %p196, %p197
      %p199 = scmp.ne.s32.totalorder %s190, %s191
      %p200 = scmp.eq.s32.totalorder %s33, 0
      %p201 = por %p199, %p200
      %p202 = scmp.ne.s32.totalorder %s190, %s191
      %p203 = scmp.eq.s32.totalorder %s34, 1
      %p204 = por %p202, %p203
      %p206 = scmp.ne.s32.totalorder %s191, %s205
      %p207 = scmp.eq.s32.totalorder %s34, 0
      %p208 = por %p206, %p207
      %s210 = sadd.s32 %s209, 1
      %p213 = scmp.eq.s32.totalorder %s28, 1
      %p214 = scmp.ne.s32.totalorder %s209, %s211
      %p215 = scmp.eq.s32.totalorder %s28, 0
      %p216 = por %p214, %p215
      %p217 = scmp.ne.s32.totalorder %s209, %s211
      %p218 = scmp.eq.s32.totalorder %s33, 1
      %p219 = por %p217, %p218
      %p220 = scmp.ne.s32.totalorder %s211, %s212
      %p221 = scmp.eq.s32.totalorder %s33, 0
      %p222 = por %p220, %p221
      %p223 = scmp.ne.s32.totalorder %s211, %s212
      %p224 = scmp.eq.s32.totalorder %s34, 1
      %p225 = por %p223, %p224
      %p227 = scmp.ne.s32.totalorder %s212, %s226
      %p228 = scmp.eq.s32.totalorder %s34, 0
      %p229 = por %p227, %p228
      %s231 = sadd.s32 %s230, 1
      %p234 = scmp.eq.s32.totalorder %s28, 1
      %p235 = scmp.ne.s32.totalorder %s230, %s232
      %p236 = scmp.eq.s32.totalorder %s28, 0
      %p237 = por %p235, %p236
      %p238 = scmp.ne.s32.totalorder %s230, %s232
      %p239 = scmp.eq.s32.totalorder %s33, 1
      %p240 = por %p238, %p239
      %p241 = scmp.ne.s32.totalorder %s232, %s233
      %p242 = scmp.eq.s32.totalorder %s33, 0
      %p243 = por %p241, %p242
      %p244 = scmp.ne.s32.totalorder %s232, %s233
      %p245 = scmp.eq.s32.totalorder %s34, 1
      %p246 = por %p244, %p245
      %p248 = scmp.ne.s32.totalorder %s233, %s247
      %p249 = scmp.eq.s32.totalorder %s34, 0
      %p250 = por %p248, %p249
      %s252 = sadd.s32 %s251, 1
      %p255 = scmp.eq.s32.totalorder %s28, 1
      %p256 = scmp.ne.s32.totalorder %s251, %s253
      %p257 = scmp.eq.s32.totalorder %s28, 0
      %p258 = por %p256, %p257
      %p259 = scmp.ne.s32.totalorder %s251, %s253
      %p260 = scmp.eq.s32.totalorder %s33, 1
      %p261 = por %p259, %p260
      %p262 = scmp.ne.s32.totalorder %s253, %s254
      %p263 = scmp.eq.s32.totalorder %s33, 0
      %p264 = por %p262, %p263
      %p265 = scmp.ne.s32.totalorder %s253, %s254
      %p266 = scmp.eq.s32.totalorder %s34, 1
      %p267 = por %p265, %p266
      %p269 = scmp.ne.s32.totalorder %s254, %s268
      %p270 = scmp.eq.s32.totalorder %s34, 0
      %p271 = por %p269, %p270
      %s273 = sadd.s32 %s272, 1
      %p276 = scmp.eq.s32.totalorder %s28, 1
      %p277 = scmp.ne.s32.totalorder %s272, %s274
      %p278 = scmp.eq.s32.totalorder %s28, 0
      %p279 = por %p277, %p278
      %p280 = scmp.ne.s32.totalorder %s272, %s274
      %p281 = scmp.eq.s32.totalorder %s33, 1
      %p282 = por %p280, %p281
      %p283 = scmp.ne.s32.totalorder %s274, %s275
      %p284 = scmp.eq.s32.totalorder %s33, 0
      %p285 = por %p283, %p284
      %p286 = scmp.ne.s32.totalorder %s274, %s275
      %p287 = scmp.eq.s32.totalorder %s34, 1
      %p288 = por %p286, %p287
      %p290 = scmp.ne.s32.totalorder %s275, %s289
      %p291 = scmp.eq.s32.totalorder %s34, 0
      %p292 = por %p290, %p291
      %s294 = sadd.s32 %s293, 1
      %p297 = scmp.eq.s32.totalorder %s28, 1
      %p298 = scmp.ne.s32.totalorder %s293, %s295
      %p299 = scmp.eq.s32.totalorder %s28, 0
      %p300 = por %p298, %p299
      %p301 = scmp.ne.s32.totalorder %s293, %s295
      %p302 = scmp.eq.s32.totalorder %s33, 1
      %p303 = por %p301, %p302
      %p304 = scmp.ne.s32.totalorder %s295, %s296
      %p305 = scmp.eq.s32.totalorder %s33, 0
      %p306 = por %p304, %p305
      %p307 = scmp.ne.s32.totalorder %s295, %s296
      %p308 = scmp.eq.s32.totalorder %s34, 1
      %p309 = por %p307, %p308
      %p311 = scmp.ne.s32.totalorder %s296, %s310
      %p312 = scmp.eq.s32.totalorder %s34, 0
      %p313 = por %p311, %p312
      %s315 = sadd.s32 %s314, 1
      %p318 = scmp.eq.s32.totalorder %s28, 1
      %p319 = scmp.ne.s32.totalorder %s314, %s316
      %p320 = scmp.eq.s32.totalorder %s28, 0
      %p321 = por %p319, %p320
      %p322 = scmp.ne.s32.totalorder %s314, %s316
      %p323 = scmp.eq.s32.totalorder %s33, 1
      %p324 = por %p322, %p323
      %p325 = scmp.ne.s32.totalorder %s316, %s317
      %p326 = scmp.eq.s32.totalorder %s33, 0
      %p327 = por %p325, %p326
      %p328 = scmp.ne.s32.totalorder %s316, %s317
      %p329 = scmp.eq.s32.totalorder %s34, 1
      %p330 = por %p328, %p329
      %p332 = scmp.ne.s32.totalorder %s317, %s331
      %p333 = scmp.eq.s32.totalorder %s34, 0
      %p334 = por %p332, %p333
      %s335 = ssub.s32 %s28, %s35
      %p336 = scmp.eq.s32.totalorder %s335, 0
      %s338 = sadd.s32 %s337, 1
      %s339 = scalar_select %p336, %s337, %s338
      %p342 = pneg %p336
      %p343 = scmp.eq.s32.totalorder %s28, 1
      %p344 = por %p342, %p343
      %p345 = scmp.ne.s32.totalorder %s337, %s340
      %p346 = scmp.eq.s32.totalorder %s28, 0
      %p347 = por %p345, %p346
      %p348 = scmp.ne.s32.totalorder %s337, %s340
      %p349 = scmp.eq.s32.totalorder %s33, 1
      %p350 = por %p348, %p349
      %p351 = scmp.ne.s32.totalorder %s340, %s341
      %p352 = scmp.eq.s32.totalorder %s33, 0
      %p353 = por %p351, %p352
      %p354 = scmp.ne.s32.totalorder %s340, %s341
      %p355 = scmp.eq.s32.totalorder %s34, 1
      %p356 = por %p354, %p355
      %p358 = scmp.ne.s32.totalorder %s341, %s357
      %p359 = scmp.eq.s32.totalorder %s34, 0
      %p360 = por %p358, %p359
      %p361 = scmp.le.s32.totalorder 1, %s28
      %p362 = scmp.lt.s32.totalorder %s28, 3
      %p363 = pnand %p361, %p362
      %p364 = pneg %p363
      // Predicated region
      $region9: #{rope_block_forward.1} parent=5 // pred_check
        _
      $region10: #{rope_block_forward.1} parent=5 // pred_check_branch
        %366 = sbr.rel (%p363) target = $region12
      $region11: #{rope_block_forward.1} parent=5 // pred_region
        %s367 = ssub.s32 %s28, 1
        // Predicated region
        $region13: #{rope_block_forward.1} parent=11 // pred_check
          %p368 = pneg %p75
        $region14: #{rope_block_forward.1} parent=11 // pred_check_branch
          %370 = sbr.rel (%p368) target = $region16
        $region15: #{rope_block_forward.1} parent=11 // pred_region
          _
        $region16: #{rope_block_forward.1} parent=11 // pred_fallthru
          _
        // Predicated region
        $region17: #{rope_block_forward.1} parent=11 // pred_check
          %p371 = pneg %p96
        $region18: #{rope_block_forward.1} parent=11 // pred_check_branch
          %373 = sbr.rel (%p371) target = $region20
        $region19: #{rope_block_forward.1} parent=11 // pred_region
          _
        $region20: #{rope_block_forward.1} parent=11 // pred_fallthru
          _
        // Predicated region
        $region21: #{rope_block_forward.1} parent=11 // pred_check
          %p374 = pneg %p117
        $region22: #{rope_block_forward.1} parent=11 // pred_check_branch
          %376 = sbr.rel (%p374) target = $region24
        $region23: #{rope_block_forward.1} parent=11 // pred_region
          _
        $region24: #{rope_block_forward.1} parent=11 // pred_fallthru
          _
        // Predicated region
        $region25: #{rope_block_forward.1} parent=11 // pred_check
          %p377 = pneg %p138
        $region26: #{rope_block_forward.1} parent=11 // pred_check_branch
          %379 = sbr.rel (%p377) target = $region28
        $region27: #{rope_block_forward.1} parent=11 // pred_region
          _
        $region28: #{rope_block_forward.1} parent=11 // pred_fallthru
          _
        // Predicated region
        $region29: #{rope_block_forward.1} parent=11 // pred_check
          %p380 = pneg %p159
        $region30: #{rope_block_forward.1} parent=11 // pred_check_branch
          %382 = sbr.rel (%p380) target = $region32
        $region31: #{rope_block_forward.1} parent=11 // pred_region
          %384 = vsyncadd [#allocation3], 0
          %s386 = sshll.u32 %s5, 4
          %s387 = int_to_ptr.hbm [resolvable:$true] %s386
          %s388 = sshll.u32 [#allocation2], 4
          %s389 = int_to_ptr.vmem [resolvable:$true] %s388
          %391 = dma.hbm_to_vmem [thread:$0]  %s387, 128, %s389, [#allocation3]
        $region32: #{rope_block_forward.1} parent=11 // pred_fallthru
          _
        // Predicated region
        $region33: #{rope_block_forward.1} parent=11 // pred_check
          %p392 = pneg %p180
        $region34: #{rope_block_forward.1} parent=11 // pred_check_branch
          %394 = sbr.rel (%p392) target = $region36
        $region35: #{rope_block_forward.1} parent=11 // pred_region
          %396 = vsyncadd [#allocation6], 0
          %s398 = sshll.u32 %s6, 4
          %s399 = int_to_ptr.hbm [resolvable:$true] %s398
          %s400 = sshll.u32 [#allocation5], 4
          %s401 = int_to_ptr.vmem [resolvable:$true] %s400
          %403 = dma.hbm_to_vmem [thread:$0]  %s399, 128, %s401, [#allocation6]
        $region36: #{rope_block_forward.1} parent=11 // pred_fallthru
          _
        // Predicated region
        $region37: #{rope_block_forward.1} parent=11 // pred_check
          %p404 = pneg %p201
        $region38: #{rope_block_forward.1} parent=11 // pred_check_branch
          %406 = sbr.rel (%p404) target = $region40
        $region39: #{rope_block_forward.1} parent=11 // pred_region
          %408 = vsyncadd [#allocation6], 0
          %s410 = sshll.u32 %s7, 4
          %s411 = int_to_ptr.hbm [resolvable:$true] %s410
          %s412 = sshll.u32 [#allocation7], 4
          %s413 = int_to_ptr.vmem [resolvable:$true] %s412
          %415 = dma.hbm_to_vmem [thread:$0]  %s411, 128, %s413, [#allocation6]
        $region40: #{rope_block_forward.1} parent=11 // pred_fallthru
          _
        // Predicated region
        $region41: #{rope_block_forward.1} parent=11 // pred_check
          %p416 = pneg %p222
        $region42: #{rope_block_forward.1} parent=11 // pred_check_branch
          %418 = sbr.rel (%p416) target = $region44
        $region43: #{rope_block_forward.1} parent=11 // pred_region
          %420 = vsyncadd [#allocation9], 0
          %s421 = sshll.u32 %s8, 4
          %s422 = int_to_ptr.hbm [resolvable:$true] %s421
          %s423 = sshll.u32 [#allocation8], 4
          %s424 = int_to_ptr.vmem [resolvable:$true] %s423
          %429 = dma.hbm_to_vmem [thread:$0]  %s422, 1024, %s424, [#allocation9], 128, 128, 8
        $region44: #{rope_block_forward.1} parent=11 // pred_fallthru
          _
        // Predicated region
        $region45: #{rope_block_forward.1} parent=11 // pred_check
          %p430 = pneg %p243
        $region46: #{rope_block_forward.1} parent=11 // pred_check_branch
          %432 = sbr.rel (%p430) target = $region48
        $region47: #{rope_block_forward.1} parent=11 // pred_region
          %434 = vsyncadd [#allocation9], 0
          %s436 = sshll.u32 %s9, 4
          %s437 = int_to_ptr.hbm [resolvable:$true] %s436
          %s438 = sshll.u32 [#allocation10], 4
          %s439 = int_to_ptr.vmem [resolvable:$true] %s438
          %441 = dma.hbm_to_vmem [thread:$0]  %s437, 64, %s439, [#allocation9]
        $region48: #{rope_block_forward.1} parent=11 // pred_fallthru
          _
        // Predicated region
        $region49: #{rope_block_forward.1} parent=11 // pred_check
          %p442 = pneg %p264
        $region50: #{rope_block_forward.1} parent=11 // pred_check_branch
          %444 = sbr.rel (%p442) target = $region52
        $region51: #{rope_block_forward.1} parent=11 // pred_region
          %446 = vsyncadd [#allocation12], 0
          %s448 = sshll.u32 %s10, 4
          %s449 = int_to_ptr.hbm [resolvable:$true] %s448
          %s450 = sshll.u32 [#allocation11], 4
          %s451 = int_to_ptr.vmem [resolvable:$true] %s450
          %453 = dma.hbm_to_vmem [thread:$0]  %s449, 64, %s451, [#allocation12]
        $region52: #{rope_block_forward.1} parent=11 // pred_fallthru
          _
        // Predicated region
        $region53: #{rope_block_forward.1} parent=11 // pred_check
          %p454 = pneg %p285
        $region54: #{rope_block_forward.1} parent=11 // pred_check_branch
          %456 = sbr.rel (%p454) target = $region56
        $region55: #{rope_block_forward.1} parent=11 // pred_region
          %458 = vsyncadd [#allocation12], 0
          %s460 = sshll.u32 %s11, 4
          %s461 = int_to_ptr.hbm [resolvable:$true] %s460
          %s462 = sshll.u32 [#allocation13], 4
          %s463 = int_to_ptr.vmem [resolvable:$true] %s462
          %465 = dma.hbm_to_vmem [thread:$0]  %s461, 64, %s463, [#allocation12]
        $region56: #{rope_block_forward.1} parent=11 // pred_fallthru
          _
        // Predicated region
        $region57: #{rope_block_forward.1} parent=11 // pred_check
          %p466 = pneg %p306
        $region58: #{rope_block_forward.1} parent=11 // pred_check_branch
          %468 = sbr.rel (%p466) target = $region60
        $region59: #{rope_block_forward.1} parent=11 // pred_region
          %470 = vsyncadd [#allocation15], 0
          %s471 = sshll.u32 %s12, 4
          %s472 = int_to_ptr.hbm [resolvable:$true] %s471
          %s473 = sshll.u32 [#allocation14], 4
          %s474 = int_to_ptr.vmem [resolvable:$true] %s473
          %479 = dma.hbm_to_vmem [thread:$0]  %s472, 512, %s474, [#allocation15], 128, 128, 8
        $region60: #{rope_block_forward.1} parent=11 // pred_fallthru
          _
        // Predicated region
        $region61: #{rope_block_forward.1} parent=11 // pred_check
          %p480 = pneg %p327
        $region62: #{rope_block_forward.1} parent=11 // pred_check_branch
          %482 = sbr.rel (%p480) target = $region64
        $region63: #{rope_block_forward.1} parent=11 // pred_region
          %484 = vsyncadd [#allocation15], 0
          %s485 = sshll.u32 %s13, 4
          %s486 = int_to_ptr.hbm [resolvable:$true] %s485
          %s487 = sshll.u32 [#allocation16], 4
          %s488 = int_to_ptr.vmem [resolvable:$true] %s487
          %493 = dma.hbm_to_vmem [thread:$0]  %s486, 512, %s488, [#allocation15], 128, 128, 8
        $region64: #{rope_block_forward.1} parent=11 // pred_fallthru
          _
      $region12: #{rope_block_forward.1} parent=5 // pred_fallthru
        _
      %p494 = scmp.lt.s32.totalorder %s28, 2
      // Predicated region
      $region65: #{rope_block_forward.1} parent=5 // pred_check
        %p495 = pneg %p494
      $region66: #{rope_block_forward.1} parent=5 // pred_check_branch
        %497 = sbr.rel (%p495) target = $region68
      $region67: #{rope_block_forward.1} parent=5 // pred_region
        // Predicated region
        $region69: #{rope_block_forward.1} parent=67 // pred_check
          %p498 = pneg %p48
        $region70: #{rope_block_forward.1} parent=67 // pred_check_branch
          %500 = sbr.rel (%p498) target = $region72
        $region71: #{rope_block_forward.1} parent=67 // pred_region
          %p501 = scmp.lt.s32.totalorder %s28, 1
          %s502 = scalar_select %p501, %s28, 1
          %s503 = smul.addr %s502, 8
          %s504 = scalar_lea.vmem %s0, %s503
        $region72: #{rope_block_forward.1} parent=67 // pred_fallthru
          _
      $region68: #{rope_block_forward.1} parent=5 // pred_fallthru
        _
      %p505 = scmp.le.s32.totalorder 1, %s28
      %p506 = scmp.lt.s32.totalorder %s28, 3
      %p507 = pnand %p505, %p506
      %p508 = pneg %p507
      // Predicated region
      $region73: #{rope_block_forward.1} parent=5 // pred_check
        _
      $region74: #{rope_block_forward.1} parent=5 // pred_check_branch
        %510 = sbr.rel (%p507) target = $region76
      $region75: #{rope_block_forward.1} parent=5 // pred_region
        %s511 = ssub.s32 %s28, 1
        // Predicated region
        $region77: #{rope_block_forward.1} parent=75 // pred_check
          %p512 = pneg %p159
        $region78: #{rope_block_forward.1} parent=75 // pred_check_branch
          %514 = sbr.rel (%p512) target = $region80
        $region79: #{rope_block_forward.1} parent=75 // pred_region
          %516 = dma.done [#allocation3], 128
        $region80: #{rope_block_forward.1} parent=75 // pred_fallthru
          _
        // Predicated region
        $region81: #{rope_block_forward.1} parent=75 // pred_check
          %p517 = pneg %p180
        $region82: #{rope_block_forward.1} parent=75 // pred_check_branch
          %519 = sbr.rel (%p517) target = $region84
        $region83: #{rope_block_forward.1} parent=75 // pred_region
          %521 = dma.done [#allocation6], 128
        $region84: #{rope_block_forward.1} parent=75 // pred_fallthru
          _
        // Predicated region
        $region85: #{rope_block_forward.1} parent=75 // pred_check
          %p522 = pneg %p201
        $region86: #{rope_block_forward.1} parent=75 // pred_check_branch
          %524 = sbr.rel (%p522) target = $region88
        $region87: #{rope_block_forward.1} parent=75 // pred_region
          %526 = dma.done [#allocation6], 128
        $region88: #{rope_block_forward.1} parent=75 // pred_fallthru
          _
        // Predicated region
        $region89: #{rope_block_forward.1} parent=75 // pred_check
          %p527 = pneg %p222
        $region90: #{rope_block_forward.1} parent=75 // pred_check_branch
          %529 = sbr.rel (%p527) target = $region92
        $region91: #{rope_block_forward.1} parent=75 // pred_region
          %531 = dma.done [#allocation9], 1024
        $region92: #{rope_block_forward.1} parent=75 // pred_fallthru
          _
        // Predicated region
        $region93: #{rope_block_forward.1} parent=75 // pred_check
          %p532 = pneg %p243
        $region94: #{rope_block_forward.1} parent=75 // pred_check_branch
          %534 = sbr.rel (%p532) target = $region96
        $region95: #{rope_block_forward.1} parent=75 // pred_region
          %536 = dma.done [#allocation9], 64
        $region96: #{rope_block_forward.1} parent=75 // pred_fallthru
          _
        // Predicated region
        $region97: #{rope_block_forward.1} parent=75 // pred_check
          %p537 = pneg %p264
        $region98: #{rope_block_forward.1} parent=75 // pred_check_branch
          %539 = sbr.rel (%p537) target = $region100
        $region99: #{rope_block_forward.1} parent=75 // pred_region
          %541 = dma.done [#allocation12], 64
        $region100: #{rope_block_forward.1} parent=75 // pred_fallthru
          _
        // Predicated region
        $region101: #{rope_block_forward.1} parent=75 // pred_check
          %p542 = pneg %p285
        $region102: #{rope_block_forward.1} parent=75 // pred_check_branch
          %544 = sbr.rel (%p542) target = $region104
        $region103: #{rope_block_forward.1} parent=75 // pred_region
          %546 = dma.done [#allocation12], 64
        $region104: #{rope_block_forward.1} parent=75 // pred_fallthru
          _
        // Predicated region
        $region105: #{rope_block_forward.1} parent=75 // pred_check
          %p547 = pneg %p306
        $region106: #{rope_block_forward.1} parent=75 // pred_check_branch
          %549 = sbr.rel (%p547) target = $region108
        $region107: #{rope_block_forward.1} parent=75 // pred_region
          %551 = dma.done [#allocation15], 512
        $region108: #{rope_block_forward.1} parent=75 // pred_fallthru
          _
        // Predicated region
        $region109: #{rope_block_forward.1} parent=75 // pred_check
          %p552 = pneg %p327
        $region110: #{rope_block_forward.1} parent=75 // pred_check_branch
          %554 = sbr.rel (%p552) target = $region112
        $region111: #{rope_block_forward.1} parent=75 // pred_region
          %556 = dma.done [#allocation15], 512
        $region112: #{rope_block_forward.1} parent=75 // pred_fallthru
          _
        %p557 = scmp.lt.s32.totalorder %s33, 1
        %s558 = scalar_select %p557, %s33, 1
        %s559 = smul.addr %s558, 8
        %s560 = scalar_lea.vmem %s0, %s559
        %p561 = pneg %p54
        %p562 = pneg %p51
        %p563 = pneg %p75
        %p564 = pneg %p72
        %p565 = pneg %p96
        %p566 = pneg %p93
        %p567 = pneg %p117
        %p568 = pneg %p114
        %p569 = pneg %p138
        %p570 = pneg %p135
        %p571 = pneg %p159
        %p572 = pneg %p156
        %p573 = pneg %p180
        %p574 = pneg %p177
        %p575 = pneg %p201
        %p576 = pneg %p198
        %p577 = pneg %p222
        %p578 = pneg %p219
        %p579 = pneg %p243
        %p580 = pneg %p240
        %p581 = pneg %p264
        %p582 = pneg %p261
        %p583 = pneg %p285
        %p584 = pneg %p282
        %p585 = pneg %p306
        %p586 = pneg %p303
        %p587 = pneg %p327
        %p588 = pneg %p324
        %p589 = pneg %p353
        %p590 = pneg %p350
        %s591 = sand.u32 %s340, 1
        %s592 = scalar_lea.sflag [#allocation4], %s591
        %s593 = sand.u32 %s340, 1
        %s594 = smul.addr %s593, 8
        %s595 = scalar_lea.vmem [#allocation17], %s594
        %p596 = scmp.lt.s32.totalorder %s33, 1
        %s597 = scalar_select %p596, %s33, 1
        %s598 = smul.addr %s597, 8
        %s599 = scalar_lea.vmem %s0, %s598
        %v601 = vld [vmem:[%s599] sm:$0xff]
        %v602 = vld [vmem:[%s1] sm:$0xff]
        %v603 = vmul.f32 %v601, %v601
        %vm604 = vcmask 261120
        %v605 = vsel %vm604, %v603, 0.0
        %606 = vadd.xlane.f32.xlu0 %v605
        %v607 = vpop.xlane.xlu0 %606
        %v608 = vrot.slane %v607, 4
        %v609 = vadd.f32 %v607, %v608
        %v610 = vrot.slane %v609, 2
        %v611 = vadd.f32 %v609, %v610
        %v612 = vrot.slane %v611, 1
        %v613 = vadd.f32 %v611, %v612
        %v614 = vrsqrt.pop %v613
        %v615 = vmul.f32 %v614, %v613
        %v616 = vmul.f32 %v615, %v614
        %v617 = vmul.f32 0.5, %v616
        %v618 = vsub.f32 1.5, %v617
        %v619 = vmul.f32 %v614, %v618
        %vm620 = vweird.f32 %v613
        %vm621 = vweird.f32 %v614
        %vm622 = vmor %vm620, %vm621
        %v623 = vsel %vm622, %v614, %v619
        %v624 = vmul.f32 %v623, 16.0
        %v625 = vmul.f32 %v601, %v624
        %v626 = vmul.f32 %v602, %v625
        %v627 = vpack.c.bf16 %v626, %v626
        %v628 = vld [vmem:[%s2] sm:$0xff]
        %v629 = vld [vmem:[%s2 + $0x8] sm:$0xff]
        %v630 = vld [vmem:[%s2 + $0x10] sm:$0xff]
        %v631 = vld [vmem:[%s2 + $0x18] sm:$0xff]
        %v636 = vunpack.c.l.b16 %v628
        %v637 = vunpack.c.h.b16 %v628
        %v638 = vunpack.c.l.b16 %v629
        %v639 = vunpack.c.h.b16 %v629
        %v640 = vunpack.c.l.b16 %v630
        %v641 = vunpack.c.h.b16 %v630
        %v642 = vunpack.c.l.b16 %v631
        %v643 = vunpack.c.h.b16 %v631
        %v644 = vpack.c.b16 %v638, %v636
        %v645 = vpack.c.b16 %v639, %v637
        %v646 = vpack.c.b16 %v642, %v640
        %v647 = vpack.c.b16 %v643, %v641
        %v653 = vsel %vm604, %v627, 0
        %655 = vmatpush.bf16.msra.mxu0 0
        %656 = vmatpush.bf16.msra.mxu0 0
        %657 = vmatpush.bf16.msra.mxu0 0
        %658 = vmatpush.bf16.msra.mxu0 0
        %659 = vmatpush.bf16.msra.mxu0 0
        %660 = vmatpush.bf16.msra.mxu0 0
        %661 = vmatpush.bf16.msra.mxu0 %v646
        %662 = vmatpush.bf16.msra.mxu0 %v644
        %663 = vmatmul.bf16.gmra.mxu0 %v653
        %v664 = vpop.f32.mrf.mxu0
        %v665 = vadd.f32 0.0, %v664
        %v666 = vpop.f32.mrf.mxu0
        %667 = vdwg.mxu0
        %668 = vmatpush.bf16.msra.mxu0 0
        %669 = vmatpush.bf16.msra.mxu0 0
        %670 = vmatpush.bf16.msra.mxu0 0
        %671 = vmatpush.bf16.msra.mxu0 0
        %672 = vmatpush.bf16.msra.mxu0 0
        %673 = vmatpush.bf16.msra.mxu0 0
        %674 = vmatpush.bf16.msra.mxu0 %v647
        %675 = vmatpush.bf16.msra.mxu0 %v645
        %676 = vmatmul.bf16.gmra.mxu0 %v653
        %v677 = vpop.f32.mrf.mxu0
        %v678 = vadd.f32 0.0, %v677
        %v679 = vpop.f32.mrf.mxu0
        %680 = vdwg.mxu0
        %682 = vrot.lane.b32.xlu0 %v665, 96
        %v683 = vpop.permute.xlu0 %682
        %686 = vrot.lane.b32.xlu0 %v678, 96
        %v687 = vpop.permute.xlu0 %686
        %v689 = vld [vmem:[#allocation2] sm:$0xff]
        %v690 = vld [vmem:[#allocation5] sm:$0xff]
        %v691 = vld [vmem:[#allocation7] sm:$0xff]
        %692 = vrot.lane.b32.xlu0 %v665, 127
        %v693 = vpop.permute.xlu0 %692
        %694 = vrot.lane.b32.xlu0 %v683, 127
        %v695 = vpop.permute.xlu0 %694
        %698 = vrot.lane.b32.xlu0 %v665, 31
        %v699 = vpop.permute.xlu0 %698
        %700 = vrot.lane.b32.xlu0 %v683, 31
        %v701 = vpop.permute.xlu0 %700
        %vm704 = vcmask 252928
        %v705 = vsel %vm704, %v693, %v699
        %v706 = vsel %vm704, %v695, %v701
        %707 = vrot.lane.b32.xlu0 %v665, 97
        %v708 = vpop.permute.xlu0 %707
        %709 = vrot.lane.b32.xlu0 %v683, 97
        %v710 = vpop.permute.xlu0 %709
        %713 = vrot.lane.b32.xlu0 %v665, 1
        %v714 = vpop.permute.xlu0 %713
        %715 = vrot.lane.b32.xlu0 %v683, 1
        %v716 = vpop.permute.xlu0 %715
        %vm719 = vcmask 7168
        %v720 = vsel %vm719, %v708, %v714
        %v721 = vsel %vm719, %v710, %v716
        %v722 = vmul.f32 %v665, %v689
        %v723 = vmul.f32 %v683, %v689
        %v724 = vmul.f32 %v705, %v690
        %v725 = vmul.f32 %v706, %v690
        %v726 = vadd.f32 %v722, %v724
        %v727 = vadd.f32 %v723, %v725
        %v728 = vmul.f32 %v720, %v691
        %v729 = vmul.f32 %v721, %v691
        %v730 = vadd.f32 %v726, %v728
        %v731 = vadd.f32 %v727, %v729
        %732 = vrot.lane.b32.xlu0 %v665, 63
        %v733 = vpop.permute.xlu0 %732
        %734 = vrot.lane.b32.xlu0 %v683, 63
        %v735 = vpop.permute.xlu0 %734
        %738 = vrot.lane.b32.xlu0 %v665, 95
        %v739 = vpop.permute.xlu0 %738
        %740 = vrot.lane.b32.xlu0 %v683, 95
        %v741 = vpop.permute.xlu0 %740
        %v744 = vsel %vm704, %v733, %v739
        %v745 = vsel %vm704, %v735, %v741
        %746 = vrot.lane.b32.xlu0 %v665, 33
        %v747 = vpop.permute.xlu0 %746
        %748 = vrot.lane.b32.xlu0 %v683, 33
        %v749 = vpop.permute.xlu0 %748
        %752 = vrot.lane.b32.xlu0 %v665, 65
        %v753 = vpop.permute.xlu0 %752
        %754 = vrot.lane.b32.xlu0 %v683, 65
        %v755 = vpop.permute.xlu0 %754
        %v758 = vsel %vm719, %v747, %v753
        %v759 = vsel %vm719, %v749, %v755
        %761 = vrot.lane.b32.xlu0 %v689, 64
        %v762 = vpop.permute.xlu0 %761
        %v764 = vmul.f32 %v665, %v762
        %v765 = vmul.f32 %v683, %v762
        %v766 = vmul.f32 %v744, %v690
        %v767 = vmul.f32 %v745, %v690
        %770 = vrot.lane.b32.xlu0 %v766, 64
        %v771 = vpop.permute.xlu0 %770
        %772 = vrot.lane.b32.xlu0 %v767, 64
        %v773 = vpop.permute.xlu0 %772
        %v776 = vadd.f32 %v764, %v771
        %v777 = vadd.f32 %v765, %v773
        %v778 = vmul.f32 %v758, %v691
        %v779 = vmul.f32 %v759, %v691
        %782 = vrot.lane.b32.xlu0 %v778, 64
        %v783 = vpop.permute.xlu0 %782
        %784 = vrot.lane.b32.xlu0 %v779, 64
        %v785 = vpop.permute.xlu0 %784
        %v788 = vadd.f32 %v776, %v783
        %v789 = vadd.f32 %v777, %v785
        %v790 = vpack.c.bf16 %v730, %v730
        %v791 = vpack.c.bf16 %v731, %v731
        %v792 = vpack.c.bf16 %v788, %v788
        %v793 = vpack.c.bf16 %v789, %v789
        %v795 = vunpack.c.l.b16 %v792
        %v796 = vpack.c.b16 %v795, %v795
        %797 = vrot.lane.b32.xlu0 %v796, 64
        %v798 = vpop.permute.xlu0 %797
        %v800 = vsel %vm604, %v790, 0
        %v803 = vsel %vm604, %v798, 0
        %805 = vmatpush.bf16.xpose.msra.mxu0 0
        %806 = vmatpush.bf16.xpose.msra.mxu0 0
        %807 = vmatpush.bf16.xpose.msra.mxu0 0
        %808 = vmatpush.bf16.xpose.msra.mxu0 0
        %809 = vmatpush.bf16.xpose.msra.mxu0 0
        %810 = vmatpush.bf16.xpose.msra.mxu0 0
        %811 = vmatpush.bf16.xpose.msra.mxu0 0
        %812 = vmatpush.bf16.xpose.msra.mxu0 %v803
        %813 = vmatmul.bf16.gmra.mxu0 %v800
        %v814 = vpop.f32.mrf.mxu0
        %v815 = vadd.f32 0.0, %v814
        %v816 = vpop.f32.mrf.mxu0
        %817 = vdwg.mxu0
        %v819 = vunpack.c.l.b16 %v793
        %v820 = vpack.c.b16 %v819, %v819
        %821 = vrot.lane.b32.xlu0 %v820, 64
        %v822 = vpop.permute.xlu0 %821
        %v824 = vsel %vm604, %v791, 0
        %v827 = vsel %vm604, %v822, 0
        %829 = vmatpush.bf16.xpose.msra.mxu0 0
        %830 = vmatpush.bf16.xpose.msra.mxu0 0
        %831 = vmatpush.bf16.xpose.msra.mxu0 0
        %832 = vmatpush.bf16.xpose.msra.mxu0 0
        %833 = vmatpush.bf16.xpose.msra.mxu0 0
        %834 = vmatpush.bf16.xpose.msra.mxu0 0
        %835 = vmatpush.bf16.xpose.msra.mxu0 0
        %836 = vmatpush.bf16.xpose.msra.mxu0 %v827
        %837 = vmatmul.bf16.gmra.mxu0 %v824
        %v838 = vpop.f32.mrf.mxu0
        %v839 = vadd.f32 0.0, %v838
        %v840 = vpop.f32.mrf.mxu0
        %841 = vdwg.mxu0
        %vm842 = vcmask 64512
        %v843 = vsel %vm842, %v815, -inf
        %844 = vmax.xlane.f32.xlu0 %v843
        %v845 = vpop.xlane.xlu0 %844
        %v846 = vsel %vm842, %v839, -inf
        %847 = vmax.xlane.f32.xlu0 %v846
        %v848 = vpop.xlane.xlu0 %847
        %v849 = vsub.f32 %v815, %v845
        %v850 = vsub.f32 %v839, %v848
        %v851 = vmul.f32 %v849, 1.442695
        %v852 = vpow.pop %v851
        %v853 = vmul.f32 %v850, 1.442695
        %v854 = vpow.pop %v853
        %v855 = vsel %vm842, %v852, 0.0
        %856 = vadd.xlane.f32.xlu0 %v855
        %v857 = vpop.xlane.xlu0 %856
        %v858 = vsel %vm842, %v854, 0.0
        %859 = vadd.xlane.f32.xlu0 %v858
        %v860 = vpop.xlane.xlu0 %859
        %v861 = vrcp.pop %v857
        %v862 = vmul.f32 %v857, %v861
        %v863 = vsub.f32 1.0, %v862
        %v864 = vmul.f32 %v861, %v863
        %v865 = vadd.f32 %v861, %v864
        %vm866 = vweird.f32 %v857
        %vm867 = vweird.f32 %v861
        %vm868 = vmor %vm866, %vm867
        %v869 = vsel %vm868, %v861, %v865
        %v870 = vand.u32 2147483647, %v857
        %vm871 = vcmp.eq.f32.partialorder %v870, 8.507059e+37
        %v872 = vand.u32 %v857, 2147483648
        %v873 = vor.u32 1.1754944e-38, %v872
        %v874 = vsel %vm871, %v873, %v869
        %v875 = vmul.f32 %v852, %v874
        %v876 = vrcp.pop %v860
        %v877 = vmul.f32 %v860, %v876
        %v878 = vsub.f32 1.0, %v877
        %v879 = vmul.f32 %v876, %v878
        %v880 = vadd.f32 %v876, %v879
        %vm881 = vweird.f32 %v860
        %vm882 = vweird.f32 %v876
        %vm883 = vmor %vm881, %vm882
        %v884 = vsel %vm883, %v876, %v880
        %v885 = vand.u32 2147483647, %v860
        %vm886 = vcmp.eq.f32.partialorder %v885, 8.507059e+37
        %v887 = vand.u32 %v860, 2147483648
        %v888 = vor.u32 1.1754944e-38, %v887
        %v889 = vsel %vm886, %v888, %v884
        %v890 = vmul.f32 %v854, %v889
        %v891 = vpack.c.bf16 %v875, %v875
        %v892 = vpack.c.bf16 %v890, %v890
        %v893 = vpack.c.bf16 %v678, %v678
        %v894 = vpack.c.bf16 %v687, %v687
        %v896 = vsel %vm842, %v891, 0
        %vm898 = vcmask 1043456
        %v900 = vsel %vm898, %v893, 0
        %902 = vmatpush.bf16.msra.mxu0 0
        %903 = vmatpush.bf16.msra.mxu0 0
        %904 = vmatpush.bf16.msra.mxu0 0
        %905 = vmatpush.bf16.msra.mxu0 0
        %906 = vmatpush.bf16.msra.mxu0 0
        %907 = vmatpush.bf16.msra.mxu0 0
        %908 = vmatpush.bf16.msra.mxu0 0
        %909 = vmatpush.bf16.msra.mxu0 %v900
        %910 = vmatmul.bf16.gmra.mxu0 %v896
        %v911 = vpop.f32.mrf.mxu0
        %v912 = vadd.f32 0.0, %v911
        %v913 = vpop.f32.mrf.mxu0
        %914 = vdwg.mxu0
        %v916 = vsel %vm842, %v892, 0
        %v919 = vsel %vm898, %v894, 0
        %921 = vmatpush.bf16.msra.mxu0 0
        %922 = vmatpush.bf16.msra.mxu0 0
        %923 = vmatpush.bf16.msra.mxu0 0
        %924 = vmatpush.bf16.msra.mxu0 0
        %925 = vmatpush.bf16.msra.mxu0 0
        %926 = vmatpush.bf16.msra.mxu0 0
        %927 = vmatpush.bf16.msra.mxu0 0
        %928 = vmatpush.bf16.msra.mxu0 %v919
        %929 = vmatmul.bf16.gmra.mxu0 %v916
        %v930 = vpop.f32.mrf.mxu0
        %v931 = vadd.f32 0.0, %v930
        %v932 = vpop.f32.mrf.mxu0
        %933 = vdwg.mxu0
        %935 = vrot.lane.b32.xlu0 %v931, 32
        %v936 = vpop.permute.xlu0 %935
        %v938 = vsel %vm604, %v912, %v936
        %v939 = vpack.c.bf16 %v938, %v938
        %v940 = vld [vmem:[%s3] sm:$0xf]
        %v941 = vld [vmem:[%s3 + $0x4] sm:$0xf]
        %v942 = vld [vmem:[%s3 + $0x8] sm:$0xf]
        %v943 = vld [vmem:[%s3 + $0xc] sm:$0xf]
        %v944 = vld [vmem:[%s3 + $0x10] sm:$0xf]
        %v945 = vld [vmem:[%s3 + $0x14] sm:$0xf]
        %v946 = vld [vmem:[%s3 + $0x18] sm:$0xf]
        %v947 = vld [vmem:[%s3 + $0x1c] sm:$0xf]
        %v948 = vld [vmem:[%s4] sm:$0x1]
        %v950 = vperm.slane %v948, 0
        %v960 = vunpack.c.l.b16 %v940
        %v961 = vunpack.c.l.b16 %v941
        %v962 = vunpack.c.l.b16 %v942
        %v963 = vunpack.c.l.b16 %v943
        %v964 = vunpack.c.l.b16 %v944
        %v965 = vunpack.c.l.b16 %v945
        %v966 = vunpack.c.l.b16 %v946
        %v967 = vunpack.c.l.b16 %v947
        %v968 = vpack.c.b16 %v961, %v960
        %v969 = vpack.c.b16 %v963, %v962
        %v970 = vpack.c.b16 %v965, %v964
        %v971 = vpack.c.b16 %v967, %v966
        %vm976 = vcmask 523264
        %v978 = vsel %vm976, %v939, 0
        %980 = vmatpush.bf16.msra.mxu0 0
        %981 = vmatpush.bf16.msra.mxu0 0
        %982 = vmatpush.bf16.msra.mxu0 0
        %983 = vmatpush.bf16.msra.mxu0 0
        %984 = vmatpush.bf16.msra.mxu0 %v971
        %985 = vmatpush.bf16.msra.mxu0 %v970
        %986 = vmatpush.bf16.msra.mxu0 %v969
        %987 = vmatpush.bf16.msra.mxu0 %v968
        %988 = vmatmul.bf16.gmra.mxu0 %v978
        %v989 = vpop.f32.mrf.mxu0
        %v990 = vadd.f32 %v950, %v989
        %v991 = vpop.f32.mrf.mxu0
        %992 = vdwg.mxu0
        %v993 = vadd.f32 %v626, %v990
        %v994 = vmul.f32 %v993, %v993
        %v995 = vsel %vm604, %v994, 0.0
        %996 = vadd.xlane.f32.xlu0 %v995
        %v997 = vpop.xlane.xlu0 %996
        %v998 = vrot.slane %v997, 4
        %v999 = vadd.f32 %v997, %v998
        %v1000 = vrot.slane %v999, 2
        %v1001 = vadd.f32 %v999, %v1000
        %v1002 = vrot.slane %v1001, 1
        %v1003 = vadd.f32 %v1001, %v1002
        %v1004 = vrsqrt.pop %v1003
        %v1005 = vmul.f32 %v1004, %v1003
        %v1006 = vmul.f32 %v1005, %v1004
        %v1007 = vmul.f32 0.5, %v1006
        %v1008 = vsub.f32 1.5, %v1007
        %v1009 = vmul.f32 %v1004, %v1008
        %vm1010 = vweird.f32 %v1003
        %vm1011 = vweird.f32 %v1004
        %vm1012 = vmor %vm1010, %vm1011
        %v1013 = vsel %vm1012, %v1004, %v1009
        %v1014 = vmul.f32 %v1013, 16.0
        %v1015 = vmul.f32 %v993, %v1014
        %v1016 = vmul.f32 %v602, %v1015
        %v1017 = vld [vmem:[#allocation14] sm:$0xff]
        %v1018 = vld [vmem:[#allocation14 + $0x8] sm:$0xff]
        %v1019 = vld [vmem:[#allocation14 + $0x10] sm:$0xff]
        %v1020 = vld [vmem:[#allocation14 + $0x18] sm:$0xff]
        %v1022 = vsel %vm604, %v1016, 0
        %1024 = vmatpush.msra.mxu0 0.0
        %1025 = vmatpush.msra.mxu0 0.0
        %1026 = vmatpush.msra.mxu0 0.0
        %1027 = vmatpush.msra.mxu0 0.0
        %1028 = vmatpush.msra.mxu0 0.0
        %1029 = vmatpush.msra.mxu0 0.0
        %1030 = vmatpush.msra.mxu0 0.0
        %1031 = vmatpush.msra.mxu0 0.0
        %1032 = vmatpush.msra.mxu0 0.0
        %1033 = vmatpush.msra.mxu0 0.0
        %1034 = vmatpush.msra.mxu0 0.0
        %1035 = vmatpush.msra.mxu0 0.0
        %1036 = vmatpush.msra.mxu0 %v1020
        %1037 = vmatpush.msra.mxu0 %v1019
        %1038 = vmatpush.msra.mxu0 %v1018
        %1039 = vmatpush.msra.mxu0 %v1017
        %1040 = vmatmul.f32.gmra.mxu0 %v1022
        %v1041 = vpop.f32.mrf.mxu0
        %v1042 = vadd.f32 0.0, %v1041
        %1043 = vdwg.mxu0
        %1045 = vrot.lane.b32.xlu0 %v1042, 124
        %v1046 = vpop.permute.xlu0 %1045
        %1048 = vrot.lane.b32.xlu0 %v1042, 120
        %v1049 = vpop.permute.xlu0 %1048
        %1051 = vrot.lane.b32.xlu0 %v1042, 116
        %v1052 = vpop.permute.xlu0 %1051
        %1054 = vrot.lane.b32.xlu0 %v1042, 112
        %v1055 = vpop.permute.xlu0 %1054
        %1057 = vrot.lane.b32.xlu0 %v1042, 108
        %v1058 = vpop.permute.xlu0 %1057
        %1060 = vrot.lane.b32.xlu0 %v1042, 104
        %v1061 = vpop.permute.xlu0 %1060
        %1063 = vrot.lane.b32.xlu0 %v1042, 100
        %v1064 = vpop.permute.xlu0 %1063
        %1066 = vxpose.xlu0.b32.start [1/16] %v1042, 128
        %1067 = vxpose.xlu0.b32.cont [2/16] %v1046, 128
        %1068 = vxpose.xlu0.b32.cont [3/16] %v1049, 128
        %1069 = vxpose.xlu0.b32.cont [4/16] %v1052, 128
        %1070 = vxpose.xlu0.b32.cont [5/16] %v1055, 128
        %1071 = vxpose.xlu0.b32.cont [6/16] %v1058, 128
        %1072 = vxpose.xlu0.b32.cont [7/16] %v1061, 128
        %1073 = vxpose.xlu0.b32.cont [8/16] %v1064, 128
        %1074 = vxpose.xlu0.b32.cont [9/16] 0.0, 128
        %1075 = vxpose.xlu0.b32.cont [10/16] 0.0, 128
        %1076 = vxpose.xlu0.b32.cont [11/16] 0.0, 128
        %1077 = vxpose.xlu0.b32.cont [12/16] 0.0, 128
        %1078 = vxpose.xlu0.b32.cont [13/16] 0.0, 128
        %1079 = vxpose.xlu0.b32.cont [14/16] 0.0, 128
        %1080 = vxpose.xlu0.b32.cont [15/16] 0.0, 128
        %1081 = vxpose.xlu0.b32.end [16/16] 0.0, 128
        %v1082 = vpop.trf.xlu0
        %v1083 = vpop.trf.xlu0
        %v1084 = vpop.trf.xlu0
        %v1085 = vpop.trf.xlu0
        %v1086 = vpop.trf.xlu0
        %v1087 = vpop.trf.xlu0
        %v1088 = vpop.trf.xlu0
        %v1089 = vpop.trf.xlu0
        %v1090 = vpop.trf.xlu0
        %v1091 = vpop.trf.xlu0
        %v1092 = vpop.trf.xlu0
        %v1093 = vpop.trf.xlu0
        %v1094 = vpop.trf.xlu0
        %v1095 = vpop.trf.xlu0
        %v1096 = vpop.trf.xlu0
        %v1097 = vpop.trf.xlu0
        %v1098 = vpack.c.bf16 %v1082, %v1082
        %v1099 = vld [vmem:[#allocation8] sm:$0xff]
        %v1100 = vld [vmem:[#allocation8 + $0x8] sm:$0xff]
        %v1101 = vld [vmem:[#allocation8 + $0x10] sm:$0xff]
        %v1102 = vld [vmem:[#allocation8 + $0x18] sm:$0xff]
        %v1103 = vld [vmem:[#allocation8 + $0x20] sm:$0xff]
        %v1104 = vld [vmem:[#allocation8 + $0x28] sm:$0xff]
        %v1105 = vld [vmem:[#allocation8 + $0x30] sm:$0xff]
        %v1106 = vld [vmem:[#allocation8 + $0x38] sm:$0xff]
        %v1115 = vunpack.c.l.b16 %v1099
        %v1116 = vunpack.c.h.b16 %v1099
        %v1117 = vunpack.c.l.b16 %v1100
        %v1118 = vunpack.c.h.b16 %v1100
        %v1119 = vunpack.c.l.b16 %v1101
        %v1120 = vunpack.c.h.b16 %v1101
        %v1121 = vunpack.c.l.b16 %v1102
        %v1122 = vunpack.c.h.b16 %v1102
        %v1123 = vunpack.c.l.b16 %v1103
        %v1124 = vunpack.c.h.b16 %v1103
        %v1125 = vunpack.c.l.b16 %v1104
        %v1126 = vunpack.c.h.b16 %v1104
        %v1127 = vunpack.c.l.b16 %v1105
        %v1128 = vunpack.c.h.b16 %v1105
        %v1129 = vunpack.c.l.b16 %v1106
        %v1130 = vunpack.c.h.b16 %v1106
        %v1131 = vpack.c.b16 %v1117, %v1115
        %v1132 = vpack.c.b16 %v1118, %v1116
        %v1133 = vpack.c.b16 %v1121, %v1119
        %v1134 = vpack.c.b16 %v1122, %v1120
        %v1135 = vpack.c.b16 %v1125, %v1123
        %v1136 = vpack.c.b16 %v1126, %v1124
        %v1137 = vpack.c.b16 %v1129, %v1127
        %v1138 = vpack.c.b16 %v1130, %v1128
        %v1148 = vsel %vm976, %v1098, 0
        %1150 = vmatpush.bf16.msra.mxu0 0
        %1151 = vmatpush.bf16.msra.mxu0 0
        %1152 = vmatpush.bf16.msra.mxu0 0
        %1153 = vmatpush.bf16.msra.mxu0 0
        %1154 = vmatpush.bf16.msra.mxu0 %v1137
        %1155 = vmatpush.bf16.msra.mxu0 %v1135
        %1156 = vmatpush.bf16.msra.mxu0 %v1133
        %1157 = vmatpush.bf16.msra.mxu0 %v1131
        %1158 = vmatmul.bf16.gmra.mxu0 %v1148
        %v1159 = vpop.f32.mrf.mxu0
        %v1160 = vadd.f32 0.0, %v1159
        %v1161 = vpop.f32.mrf.mxu0
        %1162 = vdwg.mxu0
        %1163 = vmatpush.bf16.msra.mxu0 0
        %1164 = vmatpush.bf16.msra.mxu0 0
        %1165 = vmatpush.bf16.msra.mxu0 0
        %1166 = vmatpush.bf16.msra.mxu0 0
        %1167 = vmatpush.bf16.msra.mxu0 %v1138
        %1168 = vmatpush.bf16.msra.mxu0 %v1136
        %1169 = vmatpush.bf16.msra.mxu0 %v1134
        %1170 = vmatpush.bf16.msra.mxu0 %v1132
        %1171 = vmatmul.bf16.gmra.mxu0 %v1148
        %v1172 = vpop.f32.mrf.mxu0
        %v1173 = vadd.f32 0.0, %v1172
        %v1174 = vpop.f32.mrf.mxu0
        %1175 = vdwg.mxu0
        %v1176 = vld [vmem:[#allocation10] sm:$0xf]
        %v1177 = vld [vmem:[#allocation11] sm:$0xf]
        %v1178 = vld [vmem:[#allocation13] sm:$0xf]
        %1180 = vrot.lane.b32.xlu0 %v1160, 127
        %v1181 = vpop.permute.xlu0 %1180
        %1183 = vrot.lane.b32.xlu0 %v1160, 63
        %v1184 = vpop.permute.xlu0 %1183
        %vm1186 = vcmask 515072
        %v1187 = vsel %vm1186, %v1181, %v1184
        %1188 = vrot.lane.b32.xlu0 %v1160, 65
        %v1189 = vpop.permute.xlu0 %1188
        %1191 = vrot.lane.b32.xlu0 %v1160, 1
        %v1192 = vpop.permute.xlu0 %1191
        %v1194 = vsel %vm719, %v1189, %v1192
        %v1195 = vmul.f32 %v1160, %v1176
        %v1196 = vmul.f32 %v1187, %v1177
        %v1197 = vadd.f32 %v1195, %v1196
        %v1198 = vmul.f32 %v1194, %v1178
        %v1199 = vadd.f32 %v1197, %v1198
        %v1200 = vsel %vm1186, %v1184, %v1181
        %v1201 = vsel %vm719, %v1192, %v1189
        %1203 = vrot.lane.b32.xlu0 %v1176, 64
        %v1204 = vpop.permute.xlu0 %1203
        %v1206 = vmul.f32 %v1160, %v1204
        %v1207 = vmul.f32 %v1200, %v1177
        %1209 = vrot.lane.b32.xlu0 %v1207, 64
        %v1210 = vpop.permute.xlu0 %1209
        %v1212 = vadd.f32 %v1206, %v1210
        %v1213 = vmul.f32 %v1201, %v1178
        %1215 = vrot.lane.b32.xlu0 %v1213, 64
        %v1216 = vpop.permute.xlu0 %1215
        %v1218 = vadd.f32 %v1212, %v1216
        %v1219 = vpack.c.bf16 %v1199, %v1199
        %v1220 = vpack.c.bf16 %v1218, %v1218
        %1222 = vrot.lane.b32.xlu0 %v1220, 64
        %v1223 = vpop.permute.xlu0 %1222
        %v1225 = vsel %vm976, %v1219, 0
        %v1228 = vsel %vm976, %v1223, 0
        %1230 = vmatpush.bf16.xpose.msra.mxu0 0
        %1231 = vmatpush.bf16.xpose.msra.mxu0 0
        %1232 = vmatpush.bf16.xpose.msra.mxu0 0
        %1233 = vmatpush.bf16.xpose.msra.mxu0 0
        %1234 = vmatpush.bf16.xpose.msra.mxu0 0
        %1235 = vmatpush.bf16.xpose.msra.mxu0 0
        %1236 = vmatpush.bf16.xpose.msra.mxu0 0
        %1237 = vmatpush.bf16.xpose.msra.mxu0 %v1228
        %1238 = vmatmul.bf16.gmra.mxu0 %v1225
        %v1239 = vpop.f32.mrf.mxu0
        %v1240 = vadd.f32 0.0, %v1239
        %v1241 = vpop.f32.mrf.mxu0
        %1242 = vdwg.mxu0
        %vm1243 = vcmask 27648
        %v1244 = vsel %vm1243, %v1240, -inf
        %1245 = vmax.xlane.f32.xlu0 %v1244
        %v1246 = vpop.xlane.xlu0 %1245
        %v1247 = vsub.f32 %v1240, %v1246
        %v1248 = vmul.f32 %v1247, 1.442695
        %v1249 = vpow.pop %v1248
        %v1250 = vsel %vm1243, %v1249, 0.0
        %1251 = vadd.xlane.f32.xlu0 %v1250
        %v1252 = vpop.xlane.xlu0 %1251
        %v1253 = vrcp.pop %v1252
        %v1254 = vmul.f32 %v1252, %v1253
        %v1255 = vsub.f32 1.0, %v1254
        %v1256 = vmul.f32 %v1253, %v1255
        %v1257 = vadd.f32 %v1253, %v1256
        %vm1258 = vweird.f32 %v1252
        %vm1259 = vweird.f32 %v1253
        %vm1260 = vmor %vm1258, %vm1259
        %v1261 = vsel %vm1260, %v1253, %v1257
        %v1262 = vand.u32 2147483647, %v1252
        %vm1263 = vcmp.eq.f32.partialorder %v1262, 8.507059e+37
        %v1264 = vand.u32 %v1252, 2147483648
        %v1265 = vor.u32 1.1754944e-38, %v1264
        %v1266 = vsel %vm1263, %v1265, %v1261
        %v1267 = vmul.f32 %v1249, %v1266
        %v1268 = vpack.c.bf16 %v1267, %v1267
        %v1269 = vpack.c.bf16 %v1173, %v1173
        %vm1270 = vcmask 31744
        %v1272 = vsel %vm1270, %v1268, 0
        %vm1274 = vcmask 1041408
        %v1276 = vsel %vm1274, %v1269, 0
        %1278 = vmatpush.bf16.msra.mxu0 0
        %1279 = vmatpush.bf16.msra.mxu0 0
        %1280 = vmatpush.bf16.msra.mxu0 0
        %1281 = vmatpush.bf16.msra.mxu0 0
        %1282 = vmatpush.bf16.msra.mxu0 0
        %1283 = vmatpush.bf16.msra.mxu0 0
        %1284 = vmatpush.bf16.msra.mxu0 0
        %1285 = vmatpush.bf16.msra.mxu0 %v1276
        %1286 = vmatmul.bf16.gmra.mxu0 %v1272
        %v1287 = vpop.f32.mrf.mxu0
        %v1288 = vadd.f32 0.0, %v1287
        %v1289 = vpop.f32.mrf.mxu0
        %1290 = vdwg.mxu0
        %v1291 = vadd.f32 %v1082, %v1288
        %v1293 = vrot.slane %v1291, 4
        %1294 = vrot.lane.b32.xlu0 %v1293, 120
        %v1295 = vpop.permute.xlu0 %1294
        %1297 = vrot.lane.b32.xlu0 %v1291, 112
        %v1298 = vpop.permute.xlu0 %1297
        %1300 = vrot.lane.b32.xlu0 %v1293, 104
        %v1301 = vpop.permute.xlu0 %1300
        %1303 = vrot.lane.b32.xlu0 %v1291, 96
        %v1304 = vpop.permute.xlu0 %1303
        %1306 = vrot.lane.b32.xlu0 %v1293, 88
        %v1307 = vpop.permute.xlu0 %1306
        %1309 = vrot.lane.b32.xlu0 %v1291, 80
        %v1310 = vpop.permute.xlu0 %1309
        %1312 = vrot.lane.b32.xlu0 %v1293, 72
        %v1313 = vpop.permute.xlu0 %1312
        %v1315 = vsel %vm898, %v1291, %v1295
        %v1316 = vsel %vm898, %v1298, %v1301
        %v1317 = vsel %vm898, %v1304, %v1307
        %v1318 = vsel %vm898, %v1310, %v1313
        %1319 = vxpose.xlu0.b32.start [1/16] %v1315, 128
        %1320 = vxpose.xlu0.b32.cont [2/16] %v1316, 128
        %1321 = vxpose.xlu0.b32.cont [3/16] %v1317, 128
        %1322 = vxpose.xlu0.b32.cont [4/16] %v1318, 128
        %1323 = vxpose.xlu0.b32.cont [5/16] 0.0, 128
        %1324 = vxpose.xlu0.b32.cont [6/16] 0.0, 128
        %1325 = vxpose.xlu0.b32.cont [7/16] 0.0, 128
        %1326 = vxpose.xlu0.b32.cont [8/16] 0.0, 128
        %1327 = vxpose.xlu0.b32.cont [9/16] 0.0, 128
        %1328 = vxpose.xlu0.b32.cont [10/16] 0.0, 128
        %1329 = vxpose.xlu0.b32.cont [11/16] 0.0, 128
        %1330 = vxpose.xlu0.b32.cont [12/16] 0.0, 128
        %1331 = vxpose.xlu0.b32.cont [13/16] 0.0, 128
        %1332 = vxpose.xlu0.b32.cont [14/16] 0.0, 128
        %1333 = vxpose.xlu0.b32.cont [15/16] 0.0, 128
        %1334 = vxpose.xlu0.b32.end [16/16] 0.0, 128
        %v1335 = vpop.trf.xlu0
        %v1336 = vpop.trf.xlu0
        %v1337 = vpop.trf.xlu0
        %v1338 = vpop.trf.xlu0
        %v1339 = vpop.trf.xlu0
        %v1340 = vpop.trf.xlu0
        %v1341 = vpop.trf.xlu0
        %v1342 = vpop.trf.xlu0
        %v1343 = vpop.trf.xlu0
        %v1344 = vpop.trf.xlu0
        %v1345 = vpop.trf.xlu0
        %v1346 = vpop.trf.xlu0
        %v1347 = vpop.trf.xlu0
        %v1348 = vpop.trf.xlu0
        %v1349 = vpop.trf.xlu0
        %v1350 = vpop.trf.xlu0
        %v1351 = vld [vmem:[#allocation16] sm:$0xff]
        %v1352 = vld [vmem:[#allocation16 + $0x8] sm:$0xff]
        %v1353 = vld [vmem:[#allocation16 + $0x10] sm:$0xff]
        %v1354 = vld [vmem:[#allocation16 + $0x18] sm:$0xff]
        %v1356 = vsel %vm604, %v1335, 0
        %1358 = vmatpush.msra.mxu0 0.0
        %1359 = vmatpush.msra.mxu0 0.0
        %1360 = vmatpush.msra.mxu0 0.0
        %1361 = vmatpush.msra.mxu0 0.0
        %1362 = vmatpush.msra.mxu0 0.0
        %1363 = vmatpush.msra.mxu0 0.0
        %1364 = vmatpush.msra.mxu0 0.0
        %1365 = vmatpush.msra.mxu0 0.0
        %1366 = vmatpush.msra.mxu0 0.0
        %1367 = vmatpush.msra.mxu0 0.0
        %1368 = vmatpush.msra.mxu0 0.0
        %1369 = vmatpush.msra.mxu0 0.0
        %1370 = vmatpush.msra.mxu0 %v1354
        %1371 = vmatpush.msra.mxu0 %v1353
        %1372 = vmatpush.msra.mxu0 %v1352
        %1373 = vmatpush.msra.mxu0 %v1351
        %1374 = vmatmul.f32.gmra.mxu0 %v1356
        %v1375 = vpop.f32.mrf.mxu0
        %v1376 = vadd.f32 0.0, %v1375
        %1377 = vdwg.mxu0
        %1378 = vst.msk [vmem:[%s595] sm:$0xff] %vm604, %v1376
        %s1379 = sand.u32 %s340, 1
        %s1380 = scalar_lea.sflag [#allocation4], %s1379
        %s1381 = sand.u32 %s340, 1
        %s1382 = smul.addr %s1381, 8
        %s1383 = scalar_lea.vmem [#allocation17], %s1382
        // Predicated region
        $region113: #{rope_block_forward.1} parent=75 // pred_check
          %p1384 = pneg %p350
        $region114: #{rope_block_forward.1} parent=75 // pred_check_branch
          %1386 = sbr.rel (%p1384) target = $region116
        $region115: #{rope_block_forward.1} parent=75 // pred_region
          %1388 = vsyncadd %s1380, 0
          %s1389 = smul.addr %s33, 8
          %s1390 = scalar_lea.hbm %s14, %s1389
          %s1392 = sshll.u32 %s1383, 4
          %s1393 = int_to_ptr.vmem [resolvable:$true] %s1392
          %s1394 = sshll.u32 %s1390, 4
          %s1395 = int_to_ptr.hbm [resolvable:$true] %s1394
          %1397 = dma.vmem_to_hbm [thread:$0]  %s1393, 128, %s1395, %s1380
        $region116: #{rope_block_forward.1} parent=75 // pred_fallthru
          _
      $region76: #{rope_block_forward.1} parent=5 // pred_fallthru
        _
      %p1398 = scmp.le.s32.totalorder 2, %s28
      // Predicated region
      $region117: #{rope_block_forward.1} parent=5 // pred_check
        %p1399 = pneg %p1398
      $region118: #{rope_block_forward.1} parent=5 // pred_check_branch
        %1401 = sbr.rel (%p1399) target = $region120
      $region119: #{rope_block_forward.1} parent=5 // pred_region
        %s1402 = ssub.s32 %s28, 2
        // Predicated region
        $region121: #{rope_block_forward.1} parent=119 // pred_check
          %p1403 = pneg %p356
        $region122: #{rope_block_forward.1} parent=119 // pred_check_branch
          %1405 = sbr.rel (%p1403) target = $region124
        $region123: #{rope_block_forward.1} parent=119 // pred_region
          %s1406 = sand.u32 %s341, 1
          %s1407 = scalar_lea.sflag [#allocation4], %s1406
          %s1408 = sand.u32 %s341, 1
          %s1409 = smul.addr %s1408, 8
          %s1410 = scalar_lea.vmem [#allocation17], %s1409
          %1412 = dma.done %s1407, 128
        $region124: #{rope_block_forward.1} parent=119 // pred_fallthru
          _
      $region120: #{rope_block_forward.1} parent=5 // pred_fallthru
        _
    $region6: #{rope_block_forward.1} parent=1 // loop_footer
      %s32 = sadd.s32 1, %s28
    $region7: #{rope_block_forward.1} parent=1 // loop_footer_branch
      %27 = sbr.rel target = $region3
    $region8: #{rope_block_forward.1} parent=1 // loop_exit
      _
    %1413 = vsyncpa [#allocation3], 1
    %s1414 = scalar_lea.sflag [#allocation3], 1
    %1415 = vsyncpa %s1414, 1
    %1416 = vsyncpa [#allocation6], 1
    %1417 = vsyncpa [#allocation9], 1
    %1418 = vsyncpa [#allocation12], 1
    %1419 = vsyncpa [#allocation15], 1
    %1420 = vsyncpa [#allocation4], 1
    %s1421 = scalar_lea.sflag [#allocation4], 1
    %1422 = vsyncpa %s1421, 1

</llo_original>
